<compile_context>
chip_gen: v6e
topology: v6e:2x2x1
jax: 0.10.0
libtpu: 0.0.40
codegen_flags: <defaults>
</compile_context>

<pallas_src>
import functools

import jax
import jax.numpy as jnp
from jax import lax
from jax.experimental import pallas as pl
from jax.experimental.pallas import tpu as pltpu

CENTER_EMA_DECAY = 0.9
TEACHER_TEMP = 0.04
STUDENT_TEMP = 0.1
INV_TEACHER_TEMP = 1.0 / TEACHER_TEMP
INV_STUDENT_TEMP = 1.0 / STUDENT_TEMP
VAR_EPS = 1e-6


def ema_teacher_kernel(gv_in_ref, w_ref, b_ref, cent_ref, gvs_ref, lv_ref,
                       coef_g_ref, coef_l_ref,
                       stats_ref, cent_out_ref,
                       m_t, l_t, m_g, l_g, m_l, l_l, a_g, a_l, vt_acc, vp_acc,
                       *, batch, n_global, n_local, num_clusters):
    k = pl.program_id(0)
    n_rows_t = m_t.shape[0]          # B * n_global  (teacher / student-global rows)
    n_rows_l = m_l.shape[0]          # B * n_local   (student-local rows)

    # ---- init carries on the first K stripe ----
    @pl.when(k == 0)
    def _init():
        m_t[...] = jnp.full_like(m_t, -jnp.inf)
        l_t[...] = jnp.zeros_like(l_t)
        m_g[...] = jnp.full_like(m_g, -jnp.inf)
        l_g[...] = jnp.zeros_like(l_g)
        m_l[...] = jnp.full_like(m_l, -jnp.inf)
        l_l[...] = jnp.zeros_like(l_l)
        a_g[...] = jnp.zeros_like(a_g)
        a_l[...] = jnp.zeros_like(a_l)
        vt_acc[...] = jnp.zeros_like(vt_acc)
        vp_acc[...] = jnp.zeros_like(vp_acc)

    # ---- EMA-teacher linear head on the MXU (bf16 operands, f32 accumulate) ----
    t_out = jnp.dot(gv_in_ref[...], w_ref[...],
                    preferred_element_type=jnp.float32)            # [Nt, Kb]
    t_out = t_out + b_ref[...]
    gvs = gvs_ref[...]                                             # [Nt, Kb] f32
    lv = lv_ref[...]                                               # [Nl, Kb] f32
    centers = cent_ref[...]                                        # [1, Kb]  f32

    # ---- per-column unbiased variance: rows are never blocked, so each K
    #      stripe is exact; accumulate sum over columns of sqrt(var + eps) ----
    mean_t = jnp.mean(t_out, axis=0, keepdims=True)                # [1, Kb]
    dt = t_out - mean_t
    var_t = jnp.sum(dt * dt, axis=0, keepdims=True) * (1.0 / (n_rows_t - 1))
    vt_acc[...] += jnp.sum(jnp.sqrt(var_t + VAR_EPS), keepdims=True)

    mean_l = jnp.mean(lv, axis=0, keepdims=True)
    dl = lv - mean_l
    var_l = jnp.sum(dl * dl, axis=0, keepdims=True) * (1.0 / (n_rows_l - 1))
    vp_acc[...] += jnp.sum(jnp.sqrt(var_l + VAR_EPS), keepdims=True)

    # ---- EMA center update for this column stripe (reuses mean_t) ----
    cent_out_ref[...] = (centers * CENTER_EMA_DECAY
                         + mean_t * (1.0 - CENTER_EMA_DECAY))

    # ---- online softmax carry for the centered teacher logits ----
    s = (t_out - centers) * INV_TEACHER_TEMP                       # [Nt, Kb]
    m_old = m_t[...]
    m_new = jnp.maximum(m_old, jnp.max(s, axis=-1, keepdims=True))
    alpha = jnp.exp(m_old - m_new)                                 # [Nt, 1]
    p = jnp.exp(s - m_new)                                         # [Nt, Kb]
    l_t[...] = alpha * l_t[...] + jnp.sum(p, axis=-1, keepdims=True)
    m_t[...] = m_new

    # ---- online log-sum-exp carries for the student log-softmaxes ----
    u_g = gvs * INV_STUDENT_TEMP
    mg_new = jnp.maximum(m_g[...], jnp.max(u_g, axis=-1, keepdims=True))
    l_g[...] = (jnp.exp(m_g[...] - mg_new) * l_g[...]
                + jnp.sum(jnp.exp(u_g - mg_new), axis=-1, keepdims=True))
    m_g[...] = mg_new

    u_l = lv * INV_STUDENT_TEMP
    ml_new = jnp.maximum(m_l[...], jnp.max(u_l, axis=-1, keepdims=True))
    l_l[...] = (jnp.exp(m_l[...] - ml_new) * l_l[...]
                + jnp.sum(jnp.exp(u_l - ml_new), axis=-1, keepdims=True))
    m_l[...] = ml_new

    # ---- un-normalised cross-view dot products (tiny MXU matmuls),
    #      flash-style alpha rescale when the teacher running max moves ----
    dn = (((1,), (1,)), ((), ()))
    a_g[...] = alpha * a_g[...] + lax.dot_general(
        p, u_g, dn, preferred_element_type=jnp.float32)            # [Nt, Nt]
    a_l[...] = alpha * a_l[...] + lax.dot_general(
        p, u_l, dn, preferred_element_type=jnp.float32)            # [Nt, Nl]

    # ---- finalize on the last stripe ----
    @pl.when(k == pl.num_programs(0) - 1)
    def _finalize():
        inv_l = 1.0 / l_t[...]                                     # [Nt, 1]
        # student log-softmax normalisers  sum_j (M_j + log L_j)
        s_g = jnp.sum(m_g[...] + jnp.log(l_g[...]))
        s_l = jnp.sum(m_l[...] + jnp.log(l_l[...]))
        # loss_sum = diag - (within-batch cross sums); the normaliser part of
        # the within-batch sums collapses to (n_g-1)*S_g + n_g*S_l because
        # every student column has exactly n_g teacher rows in its batch.
        loss_sum = (jnp.sum(coef_g_ref[...] * a_g[...] * inv_l)
                    + jnp.sum(coef_l_ref[...] * a_l[...] * inv_l)
                    + (n_global - 1) * s_g + n_global * s_l)
        n_terms = n_global * (n_global - 1) + n_global * n_local
        stats_ref[0] = loss_sum * (1.0 / (batch * n_terms))        # total loss
        inv_k = 1.0 / num_clusters
        stats_ref[1] = jnp.sum(vt_acc[...]) * inv_k                # target_var
        stats_ref[2] = jnp.sum(vp_acc[...]) * inv_k                # pred_var


def ema_teacher_forward(local_view, global_view_student, global_view_in,
                        teacher_w, teacher_b, centers, *, block_k=512):
    """Eval-mode EMAteacher.forward.  Returns (loss, target_var, pred_var, new_centers).

    NOTE: `centers` is not aliased/mutated; the updated buffer is returned.
    Per-generation tuning: block_k ~2048 on v6e (raise vmem_limit), ~1024 on
    v7x (64 MiB VMEM); consider pl.Buffered(3) on the W stripe for v5e.
    """
    B, n_g, K = global_view_student.shape
    n_l = local_view.shape[1]
    Ng, D_in = global_view_in.shape
    Nl = B * n_l
    assert Ng == B * n_g, "teacher rows must be b-major [b0c0, b0c1, ..., b1c0, ...]"
    assert Ng > 1 and Nl > 1, "unbiased variance needs >= 2 rows"
    kb = min(block_k, K)
    assert K % kb == 0 and (kb % 128 == 0 or kb == K), "K stripe must be lane-aligned"
    nk = K // kb

    # Lane-dense 2-D slabs; bf16 operands for the head matmul (halves W bytes).
    gvs_2d = global_view_student.reshape(Ng, K).astype(jnp.float32)
    lv_2d = local_view.reshape(Nl, K).astype(jnp.float32)
    gv_in_bf = global_view_in.astype(jnp.bfloat16)
    w_bf = teacher_w.astype(jnp.bfloat16)
    b_2d = teacher_b.reshape(1, K).astype(jnp.float32)
    centers_2d = centers.reshape(1, K).astype(jnp.float32)

    # Finalize-time coefficient matrices (within-batch pair selection):
    #   coef_g = eye - same_batch(global, global),  coef_l = -same_batch(global, local)
    bt = jnp.arange(Ng, dtype=jnp.int32) // n_g
    bl = jnp.arange(Nl, dtype=jnp.int32) // n_l
    coef_g = (jnp.eye(Ng, dtype=jnp.float32)
              - (bt[:, None] == bt[None, :]).astype(jnp.float32))
    coef_l = -(bt[:, None] == bl[None, :]).astype(jnp.float32)

    kernel = functools.partial(ema_teacher_kernel, batch=B, n_global=n_g,
                               n_local=n_l, num_clusters=K)

    out_shape = (
        jax.ShapeDtypeStruct((3,), jnp.float32),     # [loss, target_var, pred_var]
        jax.ShapeDtypeStruct((1, K), jnp.float32),   # updated centers
    )
    in_specs = [
        pl.BlockSpec((Ng, D_in), lambda k: (0, 0)),  # backbone feats (resident)
        pl.BlockSpec((D_in, kb), lambda k: (0, k)),  # W stripe (dominant HBM stream)
        pl.BlockSpec((1, kb), lambda k: (0, k)),     # bias stripe
        pl.BlockSpec((1, kb), lambda k: (0, k)),     # centers stripe
        pl.BlockSpec((Ng, kb), lambda k: (0, k)),    # student global-crop stripe
        pl.BlockSpec((Nl, kb), lambda k: (0, k)),    # student local-crop stripe
        pl.BlockSpec((Ng, Ng), lambda k: (0, 0)),    # coef_g (resident)
        pl.BlockSpec((Ng, Nl), lambda k: (0, 0)),    # coef_l (resident)
    ]
    out_specs = (
        pl.BlockSpec(memory_space=pltpu.MemorySpace.SMEM),
        pl.BlockSpec((1, kb), lambda k: (0, k)),
    )
    scratch_shapes = [
        pltpu.VMEM((Ng, 1), jnp.float32),   # m_t: teacher running max
        pltpu.VMEM((Ng, 1), jnp.float32),   # l_t: teacher running sum(exp)
        pltpu.VMEM((Ng, 1), jnp.float32),   # m_g: student-global LSE max
        pltpu.VMEM((Ng, 1), jnp.float32),   # l_g
        pltpu.VMEM((Nl, 1), jnp.float32),   # m_l: student-local LSE max
        pltpu.VMEM((Nl, 1), jnp.float32),   # l_l
        pltpu.VMEM((Ng, Ng), jnp.float32),  # a_g: teacher x student-global dots
        pltpu.VMEM((Ng, Nl), jnp.float32),  # a_l: teacher x student-local dots
        pltpu.VMEM((1, 1), jnp.float32),    # vt_acc: sum sqrt(var) teacher cols
        pltpu.VMEM((1, 1), jnp.float32),    # vp_acc: sum sqrt(var) local cols
    ]
    stats, new_centers = pl.pallas_call(
        kernel,
        grid=(nk,),
        out_shape=out_shape,
        in_specs=in_specs,
        out_specs=out_specs,
        scratch_shapes=scratch_shapes,
        compiler_params=pltpu.CompilerParams(
            dimension_semantics=("arbitrary",),      # K axis carries online state
            vmem_limit_bytes=64 * 1024 * 1024),      # v6e-oriented; shrink kb on v7x
    )(gv_in_bf, w_bf, b_2d, centers_2d, gvs_2d, lv_2d, coef_g, coef_l)
    return stats[0], stats[1], stats[2], new_centers


def reference_forward(local_view, gvs, gv_in, w, b, centers):
    # Same bf16 MXU head as the kernel so the check isolates kernel math from
    # the intentional bf16 weight quantisation; everything else exact f32.
    teacher_out = jnp.dot(gv_in.astype(jnp.bfloat16), w.astype(jnp.bfloat16),
                          preferred_element_type=jnp.float32) + b

    def compute_var(y):
        y = y.reshape(-1, y.shape[-1])
        var = jnp.var(y, axis=0, ddof=1)
        return jnp.mean(jnp.sqrt(var + VAR_EPS))

    target_var = compute_var(teacher_out)
    pred_var = compute_var(local_view)
    gv_soft = jax.nn.softmax((teacher_out - centers) / TEACHER_TEMP,
                             axis=-1).reshape(gvs.shape)
    lv_ls = jax.nn.log_softmax(local_view / STUDENT_TEMP, axis=-1)
    gvs_ls = jax.nn.log_softmax(gvs / STUDENT_TEMP, axis=-1)
    total = jnp.float32(0.0)
    n = 0
    for i in range(gvs.shape[1]):
        for j in range(gvs.shape[1]):
            if i == j:
                continue
            total = total - jnp.mean(jnp.sum(gvs_ls[:, j] * gv_soft[:, i], -1))
            n += 1
        for j in range(local_view.shape[1]):
            total = total - jnp.mean(jnp.sum(lv_ls[:, j] * gv_soft[:, i], -1))
            n += 1
    new_centers = (centers * CENTER_EMA_DECAY
                   + jnp.mean(teacher_out, axis=0, keepdims=True)
                   * (1.0 - CENTER_EMA_DECAY))
    return total / n, target_var, pred_var, new_centers


if __name__ == "__main__":
    # 2 global crops, 3 local crops, 256 clusters, block_k=128 -> 2 K stripes
    # so the online-softmax / LSE / A carries are actually exercised.
    B, n_g, n_l = 2, 2, 3
    K = 256          # num_clusters
    D_in = 64        # teacher backbone feature dim

    key = jax.random.PRNGKey(0)
    k1, k2, k3, k4, k5, k6 = jax.random.split(key, 6)

    local_view = jax.random.normal(k1, (B, n_l, K), jnp.float32)
    global_view_student = jax.random.normal(k2, (B, n_g, K), jnp.float32)
    global_view_in = jax.random.normal(k3, (B * n_g, D_in), jnp.float32)

    teacher_w = jax.random.normal(k4, (D_in, K), jnp.float32) * 0.05
    teacher_b = jax.random.normal(k5, (1, K), jnp.float32) * 0.01
    centers = jax.random.normal(k6, (1, K), jnp.float32) * 0.1

    r_loss, r_tvar, r_pvar, r_centers = jax.block_until_ready(
        reference_forward(local_view, global_view_student, global_view_in,
                          teacher_w, teacher_b, centers))

    loss, tvar, pvar, new_centers = jax.block_until_ready(
        ema_teacher_forward(local_view, global_view_student, global_view_in,
                            teacher_w, teacher_b, centers, block_k=128))

    # Loss tolerance covers MXU pass precision of the small f32 A-dots;
    # the other outputs are exact-f32 (or bit-matched bf16-head) paths.
    assert jnp.allclose(loss, r_loss, rtol=5e-2, atol=5e-2), (loss, r_loss)
    assert jnp.allclose(tvar, r_tvar, rtol=2e-3, atol=2e-4), (tvar, r_tvar)
    assert jnp.allclose(pvar, r_pvar, rtol=1e-3, atol=1e-4), (pvar, r_pvar)
    assert jnp.allclose(new_centers, r_centers, rtol=2e-3, atol=2e-4), "centers mismatch"

    print("KERNEL_OK")
</pallas_src>

<mosaic_0001>
module attributes {stable_mosaic.version = 11 : i64} {
  func.func @ema_teacher_kernel(%arg0: i32, %arg1: memref<4x64xbf16, #tpu.memory_space<vmem>>, %arg2: memref<64x128xbf16, #tpu.memory_space<vmem>>, %arg3: memref<1x128xf32, #tpu.memory_space<vmem>>, %arg4: memref<1x128xf32, #tpu.memory_space<vmem>>, %arg5: memref<4x128xf32, #tpu.memory_space<vmem>>, %arg6: memref<6x128xf32, #tpu.memory_space<vmem>>, %arg7: memref<4x4xf32, #tpu.memory_space<vmem>>, %arg8: memref<4x6xf32, #tpu.memory_space<vmem>>, %arg9: memref<3xf32, #tpu.memory_space<smem>>, %arg10: memref<1x128xf32, #tpu.memory_space<vmem>>, %arg11: memref<4x1xf32, #tpu.memory_space<vmem>>, %arg12: memref<4x1xf32, #tpu.memory_space<vmem>>, %arg13: memref<4x1xf32, #tpu.memory_space<vmem>>, %arg14: memref<4x1xf32, #tpu.memory_space<vmem>>, %arg15: memref<6x1xf32, #tpu.memory_space<vmem>>, %arg16: memref<6x1xf32, #tpu.memory_space<vmem>>, %arg17: memref<4x4xf32, #tpu.memory_space<vmem>>, %arg18: memref<4x6xf32, #tpu.memory_space<vmem>>, %arg19: memref<1x1xf32, #tpu.memory_space<vmem>>, %arg20: memref<1x1xf32, #tpu.memory_space<vmem>>) attributes {dimension_semantics = [#tpu.dimension_semantics<arbitrary>], iteration_bounds = array<i64: 2>, scalar_prefetch = 0 : i64, scratch_operands = 10 : i64, tpu.core_type = #tpu.core_type<tc>, window_params = [{pipeline_mode = #tpu.pipeline_mode<synchronous>, transform_indices = @transform_0, window_bounds = array<i64: 4, 64>}, {transform_indices = @transform_1, window_bounds = array<i64: 64, 128>}, {transform_indices = @transform_2, window_bounds = array<i64: 1, 128>}, {transform_indices = @transform_3, window_bounds = array<i64: 1, 128>}, {transform_indices = @transform_4, window_bounds = array<i64: 4, 128>}, {transform_indices = @transform_5, window_bounds = array<i64: 6, 128>}, {pipeline_mode = #tpu.pipeline_mode<synchronous>, transform_indices = @transform_6, window_bounds = array<i64: 4, 4>}, {pipeline_mode = #tpu.pipeline_mode<synchronous>, transform_indices = @transform_7, window_bounds = array<i64: 4, 6>}, {transform_indices = @transform_8, window_bounds = array<i64: 3>}, {transform_indices = @transform_9, window_bounds = array<i64: 1, 128>}]} {
    %c0_i32 = arith.constant 0 : i32
    %0 = arith.cmpi eq, %arg0, %c0_i32 : i32
    %1 = arith.extui %0 : i1 to i32
    %c0_i32_0 = arith.constant 0 : i32
    %2 = arith.cmpi ne, %1, %c0_i32_0 : i32
    scf.if %2 {
      %cst_84 = arith.constant 0xFF800000 : f32
      %135 = vector.broadcast %cst_84 : f32 to vector<4x1xf32>
      %c0_85 = arith.constant 0 : index
      %c0_86 = arith.constant 0 : index
      %136 = vector.load %arg11[%c0_85, %c0_86] : memref<4x1xf32, #tpu.memory_space<vmem>>, vector<4x1xf32>
      tpu.vector_store %arg11[%c0_85, %c0_86], %135 {strides = array<i32>} : memref<4x1xf32, #tpu.memory_space<vmem>>, vector<4x1xf32>,
      %cst_87 = arith.constant 0.000000e+00 : f32
      %137 = vector.broadcast %cst_87 : f32 to vector<4x1xf32>
      %c0_88 = arith.constant 0 : index
      %c0_89 = arith.constant 0 : index
      %138 = vector.load %arg12[%c0_88, %c0_89] : memref<4x1xf32, #tpu.memory_space<vmem>>, vector<4x1xf32>
      tpu.vector_store %arg12[%c0_88, %c0_89], %137 {strides = array<i32>} : memref<4x1xf32, #tpu.memory_space<vmem>>, vector<4x1xf32>,
      %cst_90 = arith.constant 0xFF800000 : f32
      %139 = vector.broadcast %cst_90 : f32 to vector<4x1xf32>
      %c0_91 = arith.constant 0 : index
      %c0_92 = arith.constant 0 : index
      %140 = vector.load %arg13[%c0_91, %c0_92] : memref<4x1xf32, #tpu.memory_space<vmem>>, vector<4x1xf32>
      tpu.vector_store %arg13[%c0_91, %c0_92], %139 {strides = array<i32>} : memref<4x1xf32, #tpu.memory_space<vmem>>, vector<4x1xf32>,
      %cst_93 = arith.constant 0.000000e+00 : f32
      %141 = vector.broadcast %cst_93 : f32 to vector<4x1xf32>
      %c0_94 = arith.constant 0 : index
      %c0_95 = arith.constant 0 : index
      %142 = vector.load %arg14[%c0_94, %c0_95] : memref<4x1xf32, #tpu.memory_space<vmem>>, vector<4x1xf32>
      tpu.vector_store %arg14[%c0_94, %c0_95], %141 {strides = array<i32>} : memref<4x1xf32, #tpu.memory_space<vmem>>, vector<4x1xf32>,
      %cst_96 = arith.constant 0xFF800000 : f32
      %143 = vector.broadcast %cst_96 : f32 to vector<6x1xf32>
      %c0_97 = arith.constant 0 : index
      %c0_98 = arith.constant 0 : index
      %144 = vector.load %arg15[%c0_97, %c0_98] : memref<6x1xf32, #tpu.memory_space<vmem>>, vector<6x1xf32>
      tpu.vector_store %arg15[%c0_97, %c0_98], %143 {strides = array<i32>} : memref<6x1xf32, #tpu.memory_space<vmem>>, vector<6x1xf32>,
      %cst_99 = arith.constant 0.000000e+00 : f32
      %145 = vector.broadcast %cst_99 : f32 to vector<6x1xf32>
      %c0_100 = arith.constant 0 : index
      %c0_101 = arith.constant 0 : index
      %146 = vector.load %arg16[%c0_100, %c0_101] : memref<6x1xf32, #tpu.memory_space<vmem>>, vector<6x1xf32>
      tpu.vector_store %arg16[%c0_100, %c0_101], %145 {strides = array<i32>} : memref<6x1xf32, #tpu.memory_space<vmem>>, vector<6x1xf32>,
      %cst_102 = arith.constant 0.000000e+00 : f32
      %147 = vector.broadcast %cst_102 : f32 to vector<4x4xf32>
      %c0_103 = arith.constant 0 : index
      %c0_104 = arith.constant 0 : index
      %148 = vector.load %arg17[%c0_103, %c0_104] : memref<4x4xf32, #tpu.memory_space<vmem>>, vector<4x4xf32>
      tpu.vector_store %arg17[%c0_103, %c0_104], %147 {strides = array<i32>} : memref<4x4xf32, #tpu.memory_space<vmem>>, vector<4x4xf32>,
      %cst_105 = arith.constant 0.000000e+00 : f32
      %149 = vector.broadcast %cst_105 : f32 to vector<4x6xf32>
      %c0_106 = arith.constant 0 : index
      %c0_107 = arith.constant 0 : index
      %150 = vector.load %arg18[%c0_106, %c0_107] : memref<4x6xf32, #tpu.memory_space<vmem>>, vector<4x6xf32>
      tpu.vector_store %arg18[%c0_106, %c0_107], %149 {strides = array<i32>} : memref<4x6xf32, #tpu.memory_space<vmem>>, vector<4x6xf32>,
      %cst_108 = arith.constant 0.000000e+00 : f32
      %151 = vector.broadcast %cst_108 : f32 to vector<1x1xf32>
      %c0_109 = arith.constant 0 : index
      %c0_110 = arith.constant 0 : index
      %152 = vector.load %arg19[%c0_109, %c0_110] : memref<1x1xf32, #tpu.memory_space<vmem>>, vector<1x1xf32>
      tpu.vector_store %arg19[%c0_109, %c0_110], %151 {strides = array<i32>} : memref<1x1xf32, #tpu.memory_space<vmem>>, vector<1x1xf32>,
      %cst_111 = arith.constant 0.000000e+00 : f32
      %153 = vector.broadcast %cst_111 : f32 to vector<1x1xf32>
      %c0_112 = arith.constant 0 : index
      %c0_113 = arith.constant 0 : index
      %154 = vector.load %arg20[%c0_112, %c0_113] : memref<1x1xf32, #tpu.memory_space<vmem>>, vector<1x1xf32>
      tpu.vector_store %arg20[%c0_112, %c0_113], %153 {strides = array<i32>} : memref<1x1xf32, #tpu.memory_space<vmem>>, vector<1x1xf32>,
    } else {
    }
    %c0 = arith.constant 0 : index
    %c0_1 = arith.constant 0 : index
    %3 = vector.load %arg1[%c0, %c0_1] : memref<4x64xbf16, #tpu.memory_space<vmem>>, vector<4x64xbf16>
    %c0_2 = arith.constant 0 : index
    %c0_3 = arith.constant 0 : index
    %4 = vector.load %arg2[%c0_2, %c0_3] : memref<64x128xbf16, #tpu.memory_space<vmem>>, vector<64x128xbf16>
    %cst = arith.constant dense<0.000000e+00> : vector<4x128xf32>
    %5 = tpu.matmul %3, %4, %cst {dimension_numbers = #tpu.dot_dimension_numbers<[1], [0], [0], [1], [0, 0, 1, 1], [], []>} : vector<4x64xbf16>, vector<64x128xbf16>, vector<4x128xf32> -> vector<4x128xf32>
    %c0_4 = arith.constant 0 : index
    %c0_5 = arith.constant 0 : index
    %6 = vector.load %arg3[%c0_4, %c0_5] : memref<1x128xf32, #tpu.memory_space<vmem>>, vector<1x128xf32>
    %7 = vector.broadcast %6 : vector<1x128xf32> to vector<4x128xf32>
    %8 = arith.addf %5, %7 : vector<4x128xf32>
    %c0_6 = arith.constant 0 : index
    %c0_7 = arith.constant 0 : index
    %9 = vector.load %arg5[%c0_6, %c0_7] : memref<4x128xf32, #tpu.memory_space<vmem>>, vector<4x128xf32>
    %c0_8 = arith.constant 0 : index
    %c0_9 = arith.constant 0 : index
    %10 = vector.load %arg6[%c0_8, %c0_9] : memref<6x128xf32, #tpu.memory_space<vmem>>, vector<6x128xf32>
    %c0_10 = arith.constant 0 : index
    %c0_11 = arith.constant 0 : index
    %11 = vector.load %arg4[%c0_10, %c0_11] : memref<1x128xf32, #tpu.memory_space<vmem>>, vector<1x128xf32>
    %cst_12 = arith.constant dense<0.000000e+00> : vector<128xf32>
    %12 = vector.multi_reduction <add>, %8, %cst_12 [0] : vector<4x128xf32> to vector<128xf32>
    %13 = vector.shape_cast %12 : vector<128xf32> to vector<1x128xf32>
    %cst_13 = arith.constant 4.000000e+00 : f32
    %14 = vector.broadcast %cst_13 : f32 to vector<1x128xf32>
    %15 = arith.divf %13, %14 : vector<1x128xf32>
    %16 = vector.broadcast %15 : vector<1x128xf32> to vector<4x128xf32>
    %17 = arith.subf %8, %16 : vector<4x128xf32>
    %18 = arith.mulf %17, %17 : vector<4x128xf32>
    %cst_14 = arith.constant dense<0.000000e+00> : vector<128xf32>
    %19 = vector.multi_reduction <add>, %18, %cst_14 [0] : vector<4x128xf32> to vector<128xf32>
    %20 = vector.shape_cast %19 : vector<128xf32> to vector<1x128xf32>
    %cst_15 = arith.constant 0.333333343 : f32
    %21 = vector.broadcast %cst_15 : f32 to vector<1x128xf32>
    %22 = arith.mulf %20, %21 : vector<1x128xf32>
    %c0_16 = arith.constant 0 : index
    %c0_17 = arith.constant 0 : index
    %23 = vector.load %arg19[%c0_16, %c0_17] : memref<1x1xf32, #tpu.memory_space<vmem>>, vector<1x1xf32>
    %cst_18 = arith.constant 9.99999997E-7 : f32
    %24 = vector.broadcast %cst_18 : f32 to vector<1x128xf32>
    %25 = arith.addf %22, %24 : vector<1x128xf32>
    %26 = math.sqrt %25 : vector<1x128xf32>
    %27 = vector.shape_cast %26 : vector<1x128xf32> to vector<1x1x128xf32>
    %cst_19 = arith.constant dense<0.000000e+00> : vector<1xf32>
    %28 = vector.multi_reduction <add>, %27, %cst_19 [1, 2] : vector<1x1x128xf32> to vector<1xf32>
    %29 = vector.shape_cast %28 : vector<1xf32> to vector<1x1x1xf32>
    %30 = vector.extract %29[0, 0, 0] : f32 from vector<1x1x1xf32>
    %31 = vector.broadcast %30 : f32 to vector<1x1xf32>
    %32 = arith.addf %23, %31 : vector<1x1xf32>
    %c0_20 = arith.constant 0 : index
    %c0_21 = arith.constant 0 : index
    %33 = vector.load %arg19[%c0_20, %c0_21] : memref<1x1xf32, #tpu.memory_space<vmem>>, vector<1x1xf32>
    tpu.vector_store %arg19[%c0_20, %c0_21], %32 {strides = array<i32>} : memref<1x1xf32, #tpu.memory_space<vmem>>, vector<1x1xf32>,
    %cst_22 = arith.constant dense<0.000000e+00> : vector<128xf32>
    %34 = vector.multi_reduction <add>, %10, %cst_22 [0] : vector<6x128xf32> to vector<128xf32>
    %35 = vector.shape_cast %34 : vector<128xf32> to vector<1x128xf32>
    %cst_23 = arith.constant 6.000000e+00 : f32
    %36 = vector.broadcast %cst_23 : f32 to vector<1x128xf32>
    %37 = arith.divf %35, %36 : vector<1x128xf32>
    %38 = vector.broadcast %37 : vector<1x128xf32> to vector<6x128xf32>
    %39 = arith.subf %10, %38 : vector<6x128xf32>
    %40 = arith.mulf %39, %39 : vector<6x128xf32>
    %cst_24 = arith.constant dense<0.000000e+00> : vector<128xf32>
    %41 = vector.multi_reduction <add>, %40, %cst_24 [0] : vector<6x128xf32> to vector<128xf32>
    %42 = vector.shape_cast %41 : vector<128xf32> to vector<1x128xf32>
    %cst_25 = arith.constant 2.000000e-01 : f32
    %43 = vector.broadcast %cst_25 : f32 to vector<1x128xf32>
    %44 = arith.mulf %42, %43 : vector<1x128xf32>
    %c0_26 = arith.constant 0 : index
    %c0_27 = arith.constant 0 : index
    %45 = vector.load %arg20[%c0_26, %c0_27] : memref<1x1xf32, #tpu.memory_space<vmem>>, vector<1x1xf32>
    %cst_28 = arith.constant 9.99999997E-7 : f32
    %46 = vector.broadcast %cst_28 : f32 to vector<1x128xf32>
    %47 = arith.addf %44, %46 : vector<1x128xf32>
    %48 = math.sqrt %47 : vector<1x128xf32>
    %49 = vector.shape_cast %48 : vector<1x128xf32> to vector<1x1x128xf32>
    %cst_29 = arith.constant dense<0.000000e+00> : vector<1xf32>
    %50 = vector.multi_reduction <add>, %49, %cst_29 [1, 2] : vector<1x1x128xf32> to vector<1xf32>
    %51 = vector.shape_cast %50 : vector<1xf32> to vector<1x1x1xf32>
    %52 = vector.extract %51[0, 0, 0] : f32 from vector<1x1x1xf32>
    %53 = vector.broadcast %52 : f32 to vector<1x1xf32>
    %54 = arith.addf %45, %53 : vector<1x1xf32>
    %c0_30 = arith.constant 0 : index
    %c0_31 = arith.constant 0 : index
    %55 = vector.load %arg20[%c0_30, %c0_31] : memref<1x1xf32, #tpu.memory_space<vmem>>, vector<1x1xf32>
    tpu.vector_store %arg20[%c0_30, %c0_31], %54 {strides = array<i32>} : memref<1x1xf32, #tpu.memory_space<vmem>>, vector<1x1xf32>,
    %cst_32 = arith.constant 0.899999976 : f32
    %56 = vector.broadcast %cst_32 : f32 to vector<1x128xf32>
    %57 = arith.mulf %11, %56 : vector<1x128xf32>
    %cst_33 = arith.constant 1.000000e-01 : f32
    %58 = vector.broadcast %cst_33 : f32 to vector<1x128xf32>
    %59 = arith.mulf %15, %58 : vector<1x128xf32>
    %60 = arith.addf %57, %59 : vector<1x128xf32>
    %c0_34 = arith.constant 0 : index
    %c0_35 = arith.constant 0 : index
    %61 = vector.load %arg10[%c0_34, %c0_35] : memref<1x128xf32, #tpu.memory_space<vmem>>, vector<1x128xf32>
    tpu.vector_store %arg10[%c0_34, %c0_35], %60 {strides = array<i32>} : memref<1x128xf32, #tpu.memory_space<vmem>>, vector<1x128xf32>,
    %62 = vector.broadcast %11 : vector<1x128xf32> to vector<4x128xf32>
    %63 = arith.subf %8, %62 : vector<4x128xf32>
    %cst_36 = arith.constant 2.500000e+01 : f32
    %64 = vector.broadcast %cst_36 : f32 to vector<4x128xf32>
    %65 = arith.mulf %63, %64 : vector<4x128xf32>
    %c0_37 = arith.constant 0 : index
    %c0_38 = arith.constant 0 : index
    %66 = vector.load %arg11[%c0_37, %c0_38] : memref<4x1xf32, #tpu.memory_space<vmem>>, vector<4x1xf32>
    %cst_39 = arith.constant dense<0xFF800000> : vector<4xf32>
    %67 = vector.multi_reduction <maximumf>, %65, %cst_39 [1] : vector<4x128xf32> to vector<4xf32>
    %68 = vector.shape_cast %67 : vector<4xf32> to vector<4x1xf32>
    %69 = arith.maximumf %66, %68 : vector<4x1xf32>
    %70 = arith.subf %66, %69 : vector<4x1xf32>
    %71 = math.exp %70 : vector<4x1xf32>
    %72 = vector.broadcast %69 : vector<4x1xf32> to vector<4x128xf32>
    %73 = arith.subf %65, %72 : vector<4x128xf32>
    %74 = math.exp %73 : vector<4x128xf32>
    %c0_40 = arith.constant 0 : index
    %c0_41 = arith.constant 0 : index
    %75 = vector.load %arg12[%c0_40, %c0_41] : memref<4x1xf32, #tpu.memory_space<vmem>>, vector<4x1xf32>
    %76 = arith.mulf %71, %75 : vector<4x1xf32>
    %cst_42 = arith.constant dense<0.000000e+00> : vector<4xf32>
    %77 = vector.multi_reduction <add>, %74, %cst_42 [1] : vector<4x128xf32> to vector<4xf32>
    %78 = vector.shape_cast %77 : vector<4xf32> to vector<4x1xf32>
    %79 = arith.addf %76, %78 : vector<4x1xf32>
    %c0_43 = arith.constant 0 : index
    %c0_44 = arith.constant 0 : index
    %80 = vector.load %arg12[%c0_43, %c0_44] : memref<4x1xf32, #tpu.memory_space<vmem>>, vector<4x1xf32>
    tpu.vector_store %arg12[%c0_43, %c0_44], %79 {strides = array<i32>} : memref<4x1xf32, #tpu.memory_space<vmem>>, vector<4x1xf32>,
    %c0_45 = arith.constant 0 : index
    %c0_46 = arith.constant 0 : index
    %81 = vector.load %arg11[%c0_45, %c0_46] : memref<4x1xf32, #tpu.memory_space<vmem>>, vector<4x1xf32>
    tpu.vector_store %arg11[%c0_45, %c0_46], %69 {strides = array<i32>} : memref<4x1xf32, #tpu.memory_space<vmem>>, vector<4x1xf32>,
    %cst_47 = arith.constant 1.000000e+01 : f32
    %82 = vector.broadcast %cst_47 : f32 to vector<4x128xf32>
    %83 = arith.mulf %9, %82 : vector<4x128xf32>
    %c0_48 = arith.constant 0 : index
    %c0_49 = arith.constant 0 : index
    %84 = vector.load %arg13[%c0_48, %c0_49] : memref<4x1xf32, #tpu.memory_space<vmem>>, vector<4x1xf32>
    %cst_50 = arith.constant dense<0xFF800000> : vector<4xf32>
    %85 = vector.multi_reduction <maximumf>, %83, %cst_50 [1] : vector<4x128xf32> to vector<4xf32>
    %86 = vector.shape_cast %85 : vector<4xf32> to vector<4x1xf32>
    %87 = arith.maximumf %84, %86 : vector<4x1xf32>
    %c0_51 = arith.constant 0 : index
    %c0_52 = arith.constant 0 : index
    %88 = vector.load %arg13[%c0_51, %c0_52] : memref<4x1xf32, #tpu.memory_space<vmem>>, vector<4x1xf32>
    %89 = arith.subf %88, %87 : vector<4x1xf32>
    %90 = math.exp %89 : vector<4x1xf32>
    %c0_53 = arith.constant 0 : index
    %c0_54 = arith.constant 0 : index
    %91 = vector.load %arg14[%c0_53, %c0_54] : memref<4x1xf32, #tpu.memory_space<vmem>>, vector<4x1xf32>
    %92 = arith.mulf %90, %91 : vector<4x1xf32>
    %93 = vector.broadcast %87 : vector<4x1xf32> to vector<4x128xf32>
    %94 = arith.subf %83, %93 : vector<4x128xf32>
    %95 = math.exp %94 : vector<4x128xf32>
    %cst_55 = arith.constant dense<0.000000e+00> : vector<4xf32>
    %96 = vector.multi_reduction <add>, %95, %cst_55 [1] : vector<4x128xf32> to vector<4xf32>
    %97 = vector.shape_cast %96 : vector<4xf32> to vector<4x1xf32>
    %98 = arith.addf %92, %97 : vector<4x1xf32>
    %c0_56 = arith.constant 0 : index
    %c0_57 = arith.constant 0 : index
    %99 = vector.load %arg14[%c0_56, %c0_57] : memref<4x1xf32, #tpu.memory_space<vmem>>, vector<4x1xf32>
    tpu.vector_store %arg14[%c0_56, %c0_57], %98 {strides = array<i32>} : memref<4x1xf32, #tpu.memory_space<vmem>>, vector<4x1xf32>,
    %c0_58 = arith.constant 0 : index
    %c0_59 = arith.constant 0 : index
    %100 = vector.load %arg13[%c0_58, %c0_59] : memref<4x1xf32, #tpu.memory_space<vmem>>, vector<4x1xf32>
    tpu.vector_store %arg13[%c0_58, %c0_59], %87 {strides = array<i32>} : memref<4x1xf32, #tpu.memory_space<vmem>>, vector<4x1xf32>,
    %cst_60 = arith.constant 1.000000e+01 : f32
    %101 = vector.broadcast %cst_60 : f32 to vector<6x128xf32>
    %102 = arith.mulf %10, %101 : vector<6x128xf32>
    %c0_61 = arith.constant 0 : index
    %c0_62 = arith.constant 0 : index
    %103 = vector.load %arg15[%c0_61, %c0_62] : memref<6x1xf32, #tpu.memory_space<vmem>>, vector<6x1xf32>
    %cst_63 = arith.constant dense<0xFF800000> : vector<6xf32>
    %104 = vector.multi_reduction <maximumf>, %102, %cst_63 [1] : vector<6x128xf32> to vector<6xf32>
    %105 = vector.shape_cast %104 : vector<6xf32> to vector<6x1xf32>
    %106 = arith.maximumf %103, %105 : vector<6x1xf32>
    %c0_64 = arith.constant 0 : index
    %c0_65 = arith.constant 0 : index
    %107 = vector.load %arg15[%c0_64, %c0_65] : memref<6x1xf32, #tpu.memory_space<vmem>>, vector<6x1xf32>
    %108 = arith.subf %107, %106 : vector<6x1xf32>
    %109 = math.exp %108 : vector<6x1xf32>
    %c0_66 = arith.constant 0 : index
    %c0_67 = arith.constant 0 : index
    %110 = vector.load %arg16[%c0_66, %c0_67] : memref<6x1xf32, #tpu.memory_space<vmem>>, vector<6x1xf32>
    %111 = arith.mulf %109, %110 : vector<6x1xf32>
    %112 = vector.broadcast %106 : vector<6x1xf32> to vector<6x128xf32>
    %113 = arith.subf %102, %112 : vector<6x128xf32>
    %114 = math.exp %113 : vector<6x128xf32>
    %cst_68 = arith.constant dense<0.000000e+00> : vector<6xf32>
    %115 = vector.multi_reduction <add>, %114, %cst_68 [1] : vector<6x128xf32> to vector<6xf32>
    %116 = vector.shape_cast %115 : vector<6xf32> to vector<6x1xf32>
    %117 = arith.addf %111, %116 : vector<6x1xf32>
    %c0_69 = arith.constant 0 : index
    %c0_70 = arith.constant 0 : index
    %118 = vector.load %arg16[%c0_69, %c0_70] : memref<6x1xf32, #tpu.memory_space<vmem>>, vector<6x1xf32>
    tpu.vector_store %arg16[%c0_69, %c0_70], %117 {strides = array<i32>} : memref<6x1xf32, #tpu.memory_space<vmem>>, vector<6x1xf32>,
    %c0_71 = arith.constant 0 : index
    %c0_72 = arith.constant 0 : index
    %119 = vector.load %arg15[%c0_71, %c0_72] : memref<6x1xf32, #tpu.memory_space<vmem>>, vector<6x1xf32>
    tpu.vector_store %arg15[%c0_71, %c0_72], %106 {strides = array<i32>} : memref<6x1xf32, #tpu.memory_space<vmem>>, vector<6x1xf32>,
    %c0_73 = arith.constant 0 : index
    %c0_74 = arith.constant 0 : index
    %120 = vector.load %arg17[%c0_73, %c0_74] : memref<4x4xf32, #tpu.memory_space<vmem>>, vector<4x4xf32>
    %121 = vector.broadcast %71 : vector<4x1xf32> to vector<4x4xf32>
    %122 = arith.mulf %121, %120 : vector<4x4xf32>
    %cst_75 = arith.constant dense<0.000000e+00> : vector<4x4xf32>
    %123 = tpu.matmul %74, %83, %cst_75 {dimension_numbers = #tpu.dot_dimension_numbers<[1], [1], [0], [0], [0, 0, 1, 0], [], []>} : vector<4x128xf32>, vector<4x128xf32>, vector<4x4xf32> -> vector<4x4xf32>
    %124 = arith.addf %122, %123 : vector<4x4xf32>
    %c0_76 = arith.constant 0 : index
    %c0_77 = arith.constant 0 : index
    %125 = vector.load %arg17[%c0_76, %c0_77] : memref<4x4xf32, #tpu.memory_space<vmem>>, vector<4x4xf32>
    tpu.vector_store %arg17[%c0_76, %c0_77], %124 {strides = array<i32>} : memref<4x4xf32, #tpu.memory_space<vmem>>, vector<4x4xf32>,
    %c0_78 = arith.constant 0 : index
    %c0_79 = arith.constant 0 : index
    %126 = vector.load %arg18[%c0_78, %c0_79] : memref<4x6xf32, #tpu.memory_space<vmem>>, vector<4x6xf32>
    %127 = vector.broadcast %71 : vector<4x1xf32> to vector<4x6xf32>
    %128 = arith.mulf %127, %126 : vector<4x6xf32>
    %cst_80 = arith.constant dense<0.000000e+00> : vector<4x6xf32>
    %129 = tpu.matmul %74, %102, %cst_80 {dimension_numbers = #tpu.dot_dimension_numbers<[1], [1], [0], [0], [0, 0, 1, 0], [], []>} : vector<4x128xf32>, vector<6x128xf32>, vector<4x6xf32> -> vector<4x6xf32>
    %130 = arith.addf %128, %129 : vector<4x6xf32>
    %c0_81 = arith.constant 0 : index
    %c0_82 = arith.constant 0 : index
    %131 = vector.load %arg18[%c0_81, %c0_82] : memref<4x6xf32, #tpu.memory_space<vmem>>, vector<4x6xf32>
    tpu.vector_store %arg18[%c0_81, %c0_82], %130 {strides = array<i32>} : memref<4x6xf32, #tpu.memory_space<vmem>>, vector<4x6xf32>,
    %c1_i32 = arith.constant 1 : i32
    %132 = arith.cmpi eq, %arg0, %c1_i32 : i32
    %133 = arith.extui %132 : i1 to i32
    %c0_i32_83 = arith.constant 0 : i32
    %134 = arith.cmpi ne, %133, %c0_i32_83 : i32
    scf.if %134 {
      %c0_84 = arith.constant 0 : index
      %c0_85 = arith.constant 0 : index
      %135 = vector.load %arg12[%c0_84, %c0_85] : memref<4x1xf32, #tpu.memory_space<vmem>>, vector<4x1xf32>
      %cst_86 = arith.constant 1.000000e+00 : f32
      %136 = vector.broadcast %cst_86 : f32 to vector<4x1xf32>
      %137 = arith.divf %136, %135 : vector<4x1xf32>
      %c0_87 = arith.constant 0 : index
      %c0_88 = arith.constant 0 : index
      %138 = vector.load %arg13[%c0_87, %c0_88] : memref<4x1xf32, #tpu.memory_space<vmem>>, vector<4x1xf32>
      %c0_89 = arith.constant 0 : index
      %c0_90 = arith.constant 0 : index
      %139 = vector.load %arg14[%c0_89, %c0_90] : memref<4x1xf32, #tpu.memory_space<vmem>>, vector<4x1xf32>
      %140 = math.log %139 : vector<4x1xf32>
      %141 = arith.addf %138, %140 : vector<4x1xf32>
      %142 = vector.shape_cast %141 : vector<4x1xf32> to vector<1x4x1xf32>
      %cst_91 = arith.constant dense<0.000000e+00> : vector<1xf32>
      %143 = vector.multi_reduction <add>, %142, %cst_91 [1, 2] : vector<1x4x1xf32> to vector<1xf32>
      %144 = vector.shape_cast %143 : vector<1xf32> to vector<1x1x1xf32>
      %145 = vector.extract %144[0, 0, 0] : f32 from vector<1x1x1xf32>
      %c0_92 = arith.constant 0 : index
      %c0_93 = arith.constant 0 : index
      %146 = vector.load %arg15[%c0_92, %c0_93] : memref<6x1xf32, #tpu.memory_space<vmem>>, vector<6x1xf32>
      %c0_94 = arith.constant 0 : index
      %c0_95 = arith.constant 0 : index
      %147 = vector.load %arg16[%c0_94, %c0_95] : memref<6x1xf32, #tpu.memory_space<vmem>>, vector<6x1xf32>
      %148 = math.log %147 : vector<6x1xf32>
      %149 = arith.addf %146, %148 : vector<6x1xf32>
      %150 = vector.shape_cast %149 : vector<6x1xf32> to vector<1x6x1xf32>
      %cst_96 = arith.constant dense<0.000000e+00> : vector<1xf32>
      %151 = vector.multi_reduction <add>, %150, %cst_96 [1, 2] : vector<1x6x1xf32> to vector<1xf32>
      %152 = vector.shape_cast %151 : vector<1xf32> to vector<1x1x1xf32>
      %153 = vector.extract %152[0, 0, 0] : f32 from vector<1x1x1xf32>
      %c0_97 = arith.constant 0 : index
      %c0_98 = arith.constant 0 : index
      %154 = vector.load %arg7[%c0_97, %c0_98] : memref<4x4xf32, #tpu.memory_space<vmem>>, vector<4x4xf32>
      %c0_99 = arith.constant 0 : index
      %c0_100 = arith.constant 0 : index
      %155 = vector.load %arg17[%c0_99, %c0_100] : memref<4x4xf32, #tpu.memory_space<vmem>>, vector<4x4xf32>
      %156 = arith.mulf %154, %155 : vector<4x4xf32>
      %157 = vector.broadcast %137 : vector<4x1xf32> to vector<4x4xf32>
      %158 = arith.mulf %156, %157 : vector<4x4xf32>
      %159 = vector.shape_cast %158 : vector<4x4xf32> to vector<1x4x4xf32>
      %cst_101 = arith.constant dense<0.000000e+00> : vector<1xf32>
      %160 = vector.multi_reduction <add>, %159, %cst_101 [1, 2] : vector<1x4x4xf32> to vector<1xf32>
      %161 = vector.shape_cast %160 : vector<1xf32> to vector<1x1x1xf32>
      %162 = vector.extract %161[0, 0, 0] : f32 from vector<1x1x1xf32>
      %c0_102 = arith.constant 0 : index
      %c0_103 = arith.constant 0 : index
      %163 = vector.load %arg8[%c0_102, %c0_103] : memref<4x6xf32, #tpu.memory_space<vmem>>, vector<4x6xf32>
      %c0_104 = arith.constant 0 : index
      %c0_105 = arith.constant 0 : index
      %164 = vector.load %arg18[%c0_104, %c0_105] : memref<4x6xf32, #tpu.memory_space<vmem>>, vector<4x6xf32>
      %165 = arith.mulf %163, %164 : vector<4x6xf32>
      %166 = vector.broadcast %137 : vector<4x1xf32> to vector<4x6xf32>
      %167 = arith.mulf %165, %166 : vector<4x6xf32>
      %168 = vector.shape_cast %167 : vector<4x6xf32> to vector<1x4x6xf32>
      %cst_106 = arith.constant dense<0.000000e+00> : vector<1xf32>
      %169 = vector.multi_reduction <add>, %168, %cst_106 [1, 2] : vector<1x4x6xf32> to vector<1xf32>
      %170 = vector.shape_cast %169 : vector<1xf32> to vector<1x1x1xf32>
      %171 = vector.extract %170[0, 0, 0] : f32 from vector<1x1x1xf32>
      %172 = arith.addf %162, %171 : f32
      %cst_107 = arith.constant 1.000000e+00 : f32
      %173 = arith.mulf %cst_107, %145 : f32
      %174 = arith.addf %172, %173 : f32
      %cst_108 = arith.constant 2.000000e+00 : f32
      %175 = arith.mulf %cst_108, %153 : f32
      %176 = arith.addf %174, %175 : f32
      %cst_109 = arith.constant 6.250000e-02 : f32
      %177 = arith.mulf %176, %cst_109 : f32
      %c0_110 = arith.constant 0 : index
      %178 = memref.load %arg9[%c0_110] : memref<3xf32, #tpu.memory_space<smem>>
      memref.store %177, %arg9[%c0_110] : memref<3xf32, #tpu.memory_space<smem>>
      %c0_111 = arith.constant 0 : index
      %c0_112 = arith.constant 0 : index
      %179 = vector.load %arg19[%c0_111, %c0_112] : memref<1x1xf32, #tpu.memory_space<vmem>>, vector<1x1xf32>
      %180 = vector.shape_cast %179 : vector<1x1xf32> to vector<1x1x1xf32>
      %cst_113 = arith.constant dense<0.000000e+00> : vector<1xf32>
      %181 = vector.multi_reduction <add>, %180, %cst_113 [1, 2] : vector<1x1x1xf32> to vector<1xf32>
      %182 = vector.shape_cast %181 : vector<1xf32> to vector<1x1x1xf32>
      %183 = vector.extract %182[0, 0, 0] : f32 from vector<1x1x1xf32>
      %cst_114 = arith.constant 3.906250e-03 : f32
      %184 = arith.mulf %183, %cst_114 : f32
      %c1 = arith.constant 1 : index
      %185 = memref.load %arg9[%c1] : memref<3xf32, #tpu.memory_space<smem>>
      memref.store %184, %arg9[%c1] : memref<3xf32, #tpu.memory_space<smem>>
      %c0_115 = arith.constant 0 : index
      %c0_116 = arith.constant 0 : index
      %186 = vector.load %arg20[%c0_115, %c0_116] : memref<1x1xf32, #tpu.memory_space<vmem>>, vector<1x1xf32>
      %187 = vector.shape_cast %186 : vector<1x1xf32> to vector<1x1x1xf32>
      %cst_117 = arith.constant dense<0.000000e+00> : vector<1xf32>
      %188 = vector.multi_reduction <add>, %187, %cst_117 [1, 2] : vector<1x1x1xf32> to vector<1xf32>
      %189 = vector.shape_cast %188 : vector<1xf32> to vector<1x1x1xf32>
      %190 = vector.extract %189[0, 0, 0] : f32 from vector<1x1x1xf32>
      %cst_118 = arith.constant 3.906250e-03 : f32
      %191 = arith.mulf %190, %cst_118 : f32
      %c2 = arith.constant 2 : index
      %192 = memref.load %arg9[%c2] : memref<3xf32, #tpu.memory_space<smem>>
      memref.store %191, %arg9[%c2] : memref<3xf32, #tpu.memory_space<smem>>
    } else {
    }
    return
  }
  func.func @transform_0(%arg0: i32) -> (i32, i32) {
    %c0_i32 = arith.constant 0 : i32
    %c0_i32_0 = arith.constant 0 : i32
    %c0_i32_1 = arith.constant 0 : i32
    return %c0_i32, %c0_i32_0 : i32, i32
  }
  func.func @transform_1(%arg0: i32) -> (i32, i32) {
    %c0_i32 = arith.constant 0 : i32
    %c0_i32_0 = arith.constant 0 : i32
    return %c0_i32, %arg0 : i32, i32
  }
  func.func @transform_2(%arg0: i32) -> (i32, i32) {
    %c0_i32 = arith.constant 0 : i32
    %c0_i32_0 = arith.constant 0 : i32
    return %c0_i32, %arg0 : i32, i32
  }
  func.func @transform_3(%arg0: i32) -> (i32, i32) {
    %c0_i32 = arith.constant 0 : i32
    %c0_i32_0 = arith.constant 0 : i32
    return %c0_i32, %arg0 : i32, i32
  }
  func.func @transform_4(%arg0: i32) -> (i32, i32) {
    %c0_i32 = arith.constant 0 : i32
    %c0_i32_0 = arith.constant 0 : i32
    return %c0_i32, %arg0 : i32, i32
  }
  func.func @transform_5(%arg0: i32) -> (i32, i32) {
    %c0_i32 = arith.constant 0 : i32
    %c0_i32_0 = arith.constant 0 : i32
    return %c0_i32, %arg0 : i32, i32
  }
  func.func @transform_6(%arg0: i32) -> (i32, i32) {
    %c0_i32 = arith.constant 0 : i32
    %c0_i32_0 = arith.constant 0 : i32
    %c0_i32_1 = arith.constant 0 : i32
    return %c0_i32, %c0_i32_0 : i32, i32
  }
  func.func @transform_7(%arg0: i32) -> (i32, i32) {
    %c0_i32 = arith.constant 0 : i32
    %c0_i32_0 = arith.constant 0 : i32
    %c0_i32_1 = arith.constant 0 : i32
    return %c0_i32, %c0_i32_0 : i32, i32
  }
  func.func @transform_8(%arg0: i32) -> i32 {
    %c0_i32 = arith.constant 0 : i32
    %c0_i32_0 = arith.constant 0 : i32
    return %c0_i32 : i32
  }
  func.func @transform_9(%arg0: i32) -> (i32, i32) {
    %c0_i32 = arith.constant 0 : i32
    %c0_i32_0 = arith.constant 0 : i32
    return %c0_i32, %arg0 : i32, i32
  }
}

</mosaic_0001>

<llo_original>
// kernel: tpu_custom_call.1
$region0: #{tpu_custom_call.1}
  #allocation0 [shape = 'u32[]', space=smem, size = 0x4, offset = 0x4, fixed_abs, tag = 'smem constant byte address 0x4 - core index']
  #allocation1 [shape = 'u32[144,128]{1,0:T(1,128)}', space=vmem, size = 0x12000, scoped, tag = 'internal scratch']
  #allocation2 [shape = 'f32[4,1]{1,0:T(4,128)}', space=vmem, size = 0x800, scoped, tag = 'scratch operand']
  #allocation3 [shape = 'f32[4,1]{1,0:T(4,128)}', space=vmem, size = 0x800, scoped, tag = 'scratch operand']
  #allocation4 [shape = 'f32[4,1]{1,0:T(4,128)}', space=vmem, size = 0x800, scoped, tag = 'scratch operand']
  #allocation5 [shape = 'f32[4,1]{1,0:T(4,128)}', space=vmem, size = 0x800, scoped, tag = 'scratch operand']
  #allocation6 [shape = 'f32[6,1]{1,0:T(8,128)}', space=vmem, size = 0x1000, scoped, tag = 'scratch operand']
  #allocation7 [shape = 'f32[6,1]{1,0:T(8,128)}', space=vmem, size = 0x1000, scoped, tag = 'scratch operand']
  #allocation8 [shape = 'f32[4,4]{1,0:T(4,128)}', space=vmem, size = 0x800, scoped, tag = 'scratch operand']
  #allocation9 [shape = 'f32[4,6]{1,0:T(4,128)}', space=vmem, size = 0x800, scoped, tag = 'scratch operand']
  #allocation10 [shape = 'f32[1,1]{1,0:T(1,128)}', space=vmem, size = 0x200, scoped, tag = 'scratch operand']
  #allocation11 [shape = 'f32[1,1]{1,0:T(1,128)}', space=vmem, size = 0x200, scoped, tag = 'scratch operand']
  %s0 = inlined_call_operand.hbm [shape: bf16[4,64], index: 0, kind: input, shape index: {}]
  %s1 = inlined_call_operand.hbm [shape: bf16[64,256], index: 1, kind: input, shape index: {}]
  %s2 = inlined_call_operand.hbm [shape: f32[1,256], index: 2, kind: input, shape index: {}]
  %s3 = inlined_call_operand.hbm [shape: f32[1,256], index: 3, kind: input, shape index: {}]
  %s4 = inlined_call_operand.hbm [shape: f32[4,256], index: 4, kind: input, shape index: {}]
  %s5 = inlined_call_operand.hbm [shape: f32[6,256], index: 5, kind: input, shape index: {}]
  %s6 = inlined_call_operand.vmem [shape: f32[4,4], index: 6, kind: input, shape index: {}]
  %s7 = inlined_call_operand.vmem [shape: f32[4,6], index: 7, kind: input, shape index: {}]
  %s8 = inlined_call_operand.hbm [shape: f32[3], index: 8, kind: output, shape index: {0}]
  %s9 = inlined_call_operand.hbm [shape: f32[1,256], index: 9, kind: output, shape index: {1}]
  %10 = xla_tuple %s8, %s9
  %s11 = sld [smem:[#allocation0]]
  $region105: #{tpu_custom_call.1} parent=0
    _
  %s13 = ssub.s32 1, %s11
  %s14 = scalar_select 0, %s13, %s11
  $region1: #{tpu_custom_call.1} parent=0
    #allocation12 [shape = 'u8[1024]{0}', space=vmem, size = 0x400, scoped, tag = 'input window, operand 0, single buffered']
    #allocation13 [shape = 's32[2]{0}', space=sflag, size = 0x8, scoped, tag = 'scoped memory for tpu_custom_call.1']
    #allocation14 [shape = 's32[2]{0}', space=sflag, size = 0x8, scoped, tag = 'scoped memory for tpu_custom_call.1']
    #allocation15 [shape = 's32[2]{0}', space=sflag, size = 0x8, scoped, tag = 'scoped memory for tpu_custom_call.1']
    #allocation16 [shape = 'u8[32768]{0}', space=vmem, size = 0x8000, scoped, tag = 'input window, operand 1']
    #allocation17 [shape = 's32[2]{0}', space=sflag, size = 0x8, scoped, tag = 'scoped memory for tpu_custom_call.1']
    #allocation18 [shape = 'u8[1024]{0}', space=vmem, size = 0x400, scoped, tag = 'input window, operand 2']
    #allocation19 [shape = 'u8[1024]{0}', space=vmem, size = 0x400, scoped, tag = 'input window, operand 3']
    #allocation20 [shape = 's32[2]{0}', space=sflag, size = 0x8, scoped, tag = 'scoped memory for tpu_custom_call.1']
    #allocation21 [shape = 'u8[4096]{0}', space=vmem, size = 0x1000, scoped, tag = 'input window, operand 4']
    #allocation22 [shape = 'u8[8192]{0}', space=vmem, size = 0x2000, scoped, tag = 'input window, operand 5']
    #allocation23 [shape = 's32[2]{0}', space=sflag, size = 0x8, scoped, tag = 'scoped memory for tpu_custom_call.1']
    #allocation24 [shape = 'u8[512]{0}', space=smem, size = 0x200, scoped, tag = 'output window, operand 0, single buffered']
    #allocation25 [shape = 'u8[1024]{0}', space=vmem, size = 0x400, scoped, tag = 'output window, operand 1']
    %15 = vsyncpa [#allocation13], 0
    %16 = vsyncpa [#allocation17], 0
    %s17 = scalar_lea.sflag [#allocation17], 1
    %18 = vsyncpa %s17, 0
    %19 = vsyncpa [#allocation20], 0
    %s20 = scalar_lea.sflag [#allocation20], 1
    %21 = vsyncpa %s20, 0
    %22 = vsyncpa [#allocation23], 0
    %s23 = scalar_lea.sflag [#allocation23], 1
    %24 = vsyncpa %s23, 0
    %25 = vsyncpa [#allocation15], 0
    %26 = vsyncpa [#allocation14], 0
    %s27 = scalar_lea.sflag [#allocation14], 1
    %28 = vsyncpa %s27, 0
    loop: start=0, step=1, limit=4
    $region2: #{tpu_custom_call.1} parent=1 // loop_pre_header
      _
    $region3: #{tpu_custom_call.1} parent=1 // loop_header
      %s30 = sphi 0, %s34
      %p31 = scmp.ge.s32.totalorder %s30, 4
      %s38 = sphi 0, %s38
      %s40 = sphi 0, %s38
      %s41 = sphi 0, %s40
      %s55 = sphi 0, %s41
      %s61 = sphi 0, %s63
      %s64 = sphi 0, %s61
      %s65 = sphi 0, %s64
      %s81 = sphi 0, %s65
      %s87 = sphi 0, %s89
      %s90 = sphi 0, %s87
      %s91 = sphi 0, %s90
      %s107 = sphi 0, %s91
      %s113 = sphi 0, %s115
      %s116 = sphi 0, %s113
      %s117 = sphi 0, %s116
      %s133 = sphi 0, %s117
      %s139 = sphi 0, %s141
      %s142 = sphi 0, %s139
      %s143 = sphi 0, %s142
      %s159 = sphi 0, %s143
      %s165 = sphi 0, %s167
      %s168 = sphi 0, %s165
      %s169 = sphi 0, %s168
      %s185 = sphi 0, %s169
      %s189 = sphi 0, %s189
      %s191 = sphi 0, %s189
      %s192 = sphi 0, %s191
      %s206 = sphi 0, %s192
      %s210 = sphi 0, %s210
      %s212 = sphi 0, %s210
      %s213 = sphi 0, %s212
      %s227 = sphi 0, %s213
      %s231 = sphi 0, %s231
      %s233 = sphi 0, %s231
      %s234 = sphi 0, %s233
      %s248 = sphi 0, %s234
      %s254 = sphi 0, %s256
      %s257 = sphi 0, %s254
      %s258 = sphi 0, %s257
      %s274 = sphi 0, %s258
    $region4: #{tpu_custom_call.1} parent=1 // loop_header_branch
      %33 = sbr.rel (%p31) target = $region8
    $region5: #{tpu_custom_call.1} parent=1 // loop_body
      %s35 = ssub.s32 %s30, 1
      %s36 = ssub.s32 %s30, 2
      %s37 = sadd.s32 %s30, 1
      %s39 = sadd.s32 %s38, 1
      %p42 = scmp.eq.s32.totalorder %s30, 1
      %p43 = scmp.ne.s32.totalorder %s38, %s40
      %p44 = scmp.eq.s32.totalorder %s30, 0
      %p45 = por %p43, %p44
      %p46 = scmp.ne.s32.totalorder %s38, %s40
      %p47 = scmp.eq.s32.totalorder %s35, 1
      %p48 = por %p46, %p47
      %p49 = scmp.ne.s32.totalorder %s40, %s41
      %p50 = scmp.eq.s32.totalorder %s35, 0
      %p51 = por %p49, %p50
      %p52 = scmp.ne.s32.totalorder %s40, %s41
      %p53 = scmp.eq.s32.totalorder %s36, 1
      %p54 = por %p52, %p53
      %p56 = scmp.ne.s32.totalorder %s41, %s55
      %p57 = scmp.eq.s32.totalorder %s36, 0
      %p58 = por %p56, %p57
      %s59 = ssub.s32 %s30, %s37
      %p60 = scmp.eq.s32.totalorder %s59, 0
      %s62 = sadd.s32 %s61, 1
      %s63 = scalar_select %p60, %s61, %s62
      %p66 = pneg %p60
      %p67 = scmp.eq.s32.totalorder %s30, 1
      %p68 = por %p66, %p67
      %p69 = scmp.ne.s32.totalorder %s61, %s64
      %p70 = scmp.eq.s32.totalorder %s30, 0
      %p71 = por %p69, %p70
      %p72 = scmp.ne.s32.totalorder %s61, %s64
      %p73 = scmp.eq.s32.totalorder %s35, 1
      %p74 = por %p72, %p73
      %p75 = scmp.ne.s32.totalorder %s64, %s65
      %p76 = scmp.eq.s32.totalorder %s35, 0
      %p77 = por %p75, %p76
      %p78 = scmp.ne.s32.totalorder %s64, %s65
      %p79 = scmp.eq.s32.totalorder %s36, 1
      %p80 = por %p78, %p79
      %p82 = scmp.ne.s32.totalorder %s65, %s81
      %p83 = scmp.eq.s32.totalorder %s36, 0
      %p84 = por %p82, %p83
      %s85 = ssub.s32 %s30, %s37
      %p86 = scmp.eq.s32.totalorder %s85, 0
      %s88 = sadd.s32 %s87, 1
      %s89 = scalar_select %p86, %s87, %s88
      %p92 = pneg %p86
      %p93 = scmp.eq.s32.totalorder %s30, 1
      %p94 = por %p92, %p93
      %p95 = scmp.ne.s32.totalorder %s87, %s90
      %p96 = scmp.eq.s32.totalorder %s30, 0
      %p97 = por %p95, %p96
      %p98 = scmp.ne.s32.totalorder %s87, %s90
      %p99 = scmp.eq.s32.totalorder %s35, 1
      %p100 = por %p98, %p99
      %p101 = scmp.ne.s32.totalorder %s90, %s91
      %p102 = scmp.eq.s32.totalorder %s35, 0
      %p103 = por %p101, %p102
      %p104 = scmp.ne.s32.totalorder %s90, %s91
      %p105 = scmp.eq.s32.totalorder %s36, 1
      %p106 = por %p104, %p105
      %p108 = scmp.ne.s32.totalorder %s91, %s107
      %p109 = scmp.eq.s32.totalorder %s36, 0
      %p110 = por %p108, %p109
      %s111 = ssub.s32 %s30, %s37
      %p112 = scmp.eq.s32.totalorder %s111, 0
      %s114 = sadd.s32 %s113, 1
      %s115 = scalar_select %p112, %s113, %s114
      %p118 = pneg %p112
      %p119 = scmp.eq.s32.totalorder %s30, 1
      %p120 = por %p118, %p119
      %p121 = scmp.ne.s32.totalorder %s113, %s116
      %p122 = scmp.eq.s32.totalorder %s30, 0
      %p123 = por %p121, %p122
      %p124 = scmp.ne.s32.totalorder %s113, %s116
      %p125 = scmp.eq.s32.totalorder %s35, 1
      %p126 = por %p124, %p125
      %p127 = scmp.ne.s32.totalorder %s116, %s117
      %p128 = scmp.eq.s32.totalorder %s35, 0
      %p129 = por %p127, %p128
      %p130 = scmp.ne.s32.totalorder %s116, %s117
      %p131 = scmp.eq.s32.totalorder %s36, 1
      %p132 = por %p130, %p131
      %p134 = scmp.ne.s32.totalorder %s117, %s133
      %p135 = scmp.eq.s32.totalorder %s36, 0
      %p136 = por %p134, %p135
      %s137 = ssub.s32 %s30, %s37
      %p138 = scmp.eq.s32.totalorder %s137, 0
      %s140 = sadd.s32 %s139, 1
      %s141 = scalar_select %p138, %s139, %s140
      %p144 = pneg %p138
      %p145 = scmp.eq.s32.totalorder %s30, 1
      %p146 = por %p144, %p145
      %p147 = scmp.ne.s32.totalorder %s139, %s142
      %p148 = scmp.eq.s32.totalorder %s30, 0
      %p149 = por %p147, %p148
      %p150 = scmp.ne.s32.totalorder %s139, %s142
      %p151 = scmp.eq.s32.totalorder %s35, 1
      %p152 = por %p150, %p151
      %p153 = scmp.ne.s32.totalorder %s142, %s143
      %p154 = scmp.eq.s32.totalorder %s35, 0
      %p155 = por %p153, %p154
      %p156 = scmp.ne.s32.totalorder %s142, %s143
      %p157 = scmp.eq.s32.totalorder %s36, 1
      %p158 = por %p156, %p157
      %p160 = scmp.ne.s32.totalorder %s143, %s159
      %p161 = scmp.eq.s32.totalorder %s36, 0
      %p162 = por %p160, %p161
      %s163 = ssub.s32 %s30, %s37
      %p164 = scmp.eq.s32.totalorder %s163, 0
      %s166 = sadd.s32 %s165, 1
      %s167 = scalar_select %p164, %s165, %s166
      %p170 = pneg %p164
      %p171 = scmp.eq.s32.totalorder %s30, 1
      %p172 = por %p170, %p171
      %p173 = scmp.ne.s32.totalorder %s165, %s168
      %p174 = scmp.eq.s32.totalorder %s30, 0
      %p175 = por %p173, %p174
      %p176 = scmp.ne.s32.totalorder %s165, %s168
      %p177 = scmp.eq.s32.totalorder %s35, 1
      %p178 = por %p176, %p177
      %p179 = scmp.ne.s32.totalorder %s168, %s169
      %p180 = scmp.eq.s32.totalorder %s35, 0
      %p181 = por %p179, %p180
      %p182 = scmp.ne.s32.totalorder %s168, %s169
      %p183 = scmp.eq.s32.totalorder %s36, 1
      %p184 = por %p182, %p183
      %p186 = scmp.ne.s32.totalorder %s169, %s185
      %p187 = scmp.eq.s32.totalorder %s36, 0
      %p188 = por %p186, %p187
      %s190 = sadd.s32 %s189, 1
      %p193 = scmp.eq.s32.totalorder %s30, 1
      %p194 = scmp.ne.s32.totalorder %s189, %s191
      %p195 = scmp.eq.s32.totalorder %s30, 0
      %p196 = por %p194, %p195
      %p197 = scmp.ne.s32.totalorder %s189, %s191
      %p198 = scmp.eq.s32.totalorder %s35, 1
      %p199 = por %p197, %p198
      %p200 = scmp.ne.s32.totalorder %s191, %s192
      %p201 = scmp.eq.s32.totalorder %s35, 0
      %p202 = por %p200, %p201
      %p203 = scmp.ne.s32.totalorder %s191, %s192
      %p204 = scmp.eq.s32.totalorder %s36, 1
      %p205 = por %p203, %p204
      %p207 = scmp.ne.s32.totalorder %s192, %s206
      %p208 = scmp.eq.s32.totalorder %s36, 0
      %p209 = por %p207, %p208
      %s211 = sadd.s32 %s210, 1
      %p214 = scmp.eq.s32.totalorder %s30, 1
      %p215 = scmp.ne.s32.totalorder %s210, %s212
      %p216 = scmp.eq.s32.totalorder %s30, 0
      %p217 = por %p215, %p216
      %p218 = scmp.ne.s32.totalorder %s210, %s212
      %p219 = scmp.eq.s32.totalorder %s35, 1
      %p220 = por %p218, %p219
      %p221 = scmp.ne.s32.totalorder %s212, %s213
      %p222 = scmp.eq.s32.totalorder %s35, 0
      %p223 = por %p221, %p222
      %p224 = scmp.ne.s32.totalorder %s212, %s213
      %p225 = scmp.eq.s32.totalorder %s36, 1
      %p226 = por %p224, %p225
      %p228 = scmp.ne.s32.totalorder %s213, %s227
      %p229 = scmp.eq.s32.totalorder %s36, 0
      %p230 = por %p228, %p229
      %s232 = sadd.s32 %s231, 1
      %p235 = scmp.eq.s32.totalorder %s30, 1
      %p236 = scmp.ne.s32.totalorder %s231, %s233
      %p237 = scmp.eq.s32.totalorder %s30, 0
      %p238 = por %p236, %p237
      %p239 = scmp.ne.s32.totalorder %s231, %s233
      %p240 = scmp.eq.s32.totalorder %s35, 1
      %p241 = por %p239, %p240
      %p242 = scmp.ne.s32.totalorder %s233, %s234
      %p243 = scmp.eq.s32.totalorder %s35, 0
      %p244 = por %p242, %p243
      %p245 = scmp.ne.s32.totalorder %s233, %s234
      %p246 = scmp.eq.s32.totalorder %s36, 1
      %p247 = por %p245, %p246
      %p249 = scmp.ne.s32.totalorder %s234, %s248
      %p250 = scmp.eq.s32.totalorder %s36, 0
      %p251 = por %p249, %p250
      %s252 = ssub.s32 %s30, %s37
      %p253 = scmp.eq.s32.totalorder %s252, 0
      %s255 = sadd.s32 %s254, 1
      %s256 = scalar_select %p253, %s254, %s255
      %p259 = pneg %p253
      %p260 = scmp.eq.s32.totalorder %s30, 1
      %p261 = por %p259, %p260
      %p262 = scmp.ne.s32.totalorder %s254, %s257
      %p263 = scmp.eq.s32.totalorder %s30, 0
      %p264 = por %p262, %p263
      %p265 = scmp.ne.s32.totalorder %s254, %s257
      %p266 = scmp.eq.s32.totalorder %s35, 1
      %p267 = por %p265, %p266
      %p268 = scmp.ne.s32.totalorder %s257, %s258
      %p269 = scmp.eq.s32.totalorder %s35, 0
      %p270 = por %p268, %p269
      %p271 = scmp.ne.s32.totalorder %s257, %s258
      %p272 = scmp.eq.s32.totalorder %s36, 1
      %p273 = por %p271, %p272
      %p275 = scmp.ne.s32.totalorder %s258, %s274
      %p276 = scmp.eq.s32.totalorder %s36, 0
      %p277 = por %p275, %p276
      %p278 = scmp.le.s32.totalorder 1, %s30
      %p279 = scmp.lt.s32.totalorder %s30, 3
      %p280 = pnand %p278, %p279
      %p281 = pneg %p280
      // Predicated region
      $region9: #{tpu_custom_call.1} parent=5 // pred_check
        _
      $region10: #{tpu_custom_call.1} parent=5 // pred_check_branch
        %283 = sbr.rel (%p280) target = $region12
      $region11: #{tpu_custom_call.1} parent=5 // pred_region
        %s284 = ssub.s32 %s30, 1
        // Predicated region
        $region13: #{tpu_custom_call.1} parent=11 // pred_check
          %p285 = pneg %p51
        $region14: #{tpu_custom_call.1} parent=11 // pred_check_branch
          %287 = sbr.rel (%p285) target = $region16
        $region15: #{tpu_custom_call.1} parent=11 // pred_region
          %s289 = ssub.s32 32, 32
          %290 = vsyncadd [#allocation13], %s289
          %s292 = sshll.u32 [#allocation12], 4
          %s293 = int_to_ptr.vmem [resolvable:$true] %s292
          %295 = dma.hbm_to_vmem [thread:$0]  %s0, 32, %s293, [#allocation13]
        $region16: #{tpu_custom_call.1} parent=11 // pred_fallthru
          _
        // Predicated region
        $region17: #{tpu_custom_call.1} parent=11 // pred_check
          %p296 = pneg %p202
        $region18: #{tpu_custom_call.1} parent=11 // pred_check_branch
          %298 = sbr.rel (%p296) target = $region20
        $region19: #{tpu_custom_call.1} parent=11 // pred_region
          _
        $region20: #{tpu_custom_call.1} parent=11 // pred_fallthru
          _
        // Predicated region
        $region21: #{tpu_custom_call.1} parent=11 // pred_check
          %p299 = pneg %p223
        $region22: #{tpu_custom_call.1} parent=11 // pred_check_branch
          %301 = sbr.rel (%p299) target = $region24
        $region23: #{tpu_custom_call.1} parent=11 // pred_region
          _
        $region24: #{tpu_custom_call.1} parent=11 // pred_fallthru
          _
      $region12: #{tpu_custom_call.1} parent=5 // pred_fallthru
        _
      %p302 = scmp.lt.s32.totalorder %s30, 2
      // Predicated region
      $region25: #{tpu_custom_call.1} parent=5 // pred_check
        %p303 = pneg %p302
      $region26: #{tpu_custom_call.1} parent=5 // pred_check_branch
        %305 = sbr.rel (%p303) target = $region28
      $region27: #{tpu_custom_call.1} parent=5 // pred_region
        // Predicated region
        $region29: #{tpu_custom_call.1} parent=27 // pred_check
          %p306 = pneg %p71
        $region30: #{tpu_custom_call.1} parent=27 // pred_check_branch
          %308 = sbr.rel (%p306) target = $region32
        $region31: #{tpu_custom_call.1} parent=27 // pred_region
          %s309 = sand.u32 %s30, 1
          %s310 = scalar_lea.sflag [#allocation17], %s309
          %s311 = sand.u32 %s61, 1
          %s312 = smul.addr %s311, 32
          %s313 = scalar_lea.vmem [#allocation16], %s312
          %s315 = ssub.s32 512, 512
          %316 = vsyncadd %s310, %s315
          %s317 = smul.addr %s30, 64
          %s318 = scalar_lea.hbm %s1, %s317
          %s319 = sshll.u32 %s313, 4
          %s320 = int_to_ptr.vmem [resolvable:$true] %s319
          %325 = dma.hbm_to_vmem [thread:$0]  %s318, 512, %s320, %s310, 128, 64, 4
        $region32: #{tpu_custom_call.1} parent=27 // pred_fallthru
          _
        // Predicated region
        $region33: #{tpu_custom_call.1} parent=27 // pred_check
          %p326 = pneg %p97
        $region34: #{tpu_custom_call.1} parent=27 // pred_check_branch
          %328 = sbr.rel (%p326) target = $region36
        $region35: #{tpu_custom_call.1} parent=27 // pred_region
          %s329 = sand.u32 %s30, 1
          %s330 = scalar_lea.sflag [#allocation17], %s329
          %s331 = sand.u32 %s87, 1
          %s332 = scalar_lea.vmem [#allocation18], %s331
          %s334 = ssub.s32 16, 16
          %335 = vsyncadd %s330, %s334
          %s336 = smul.addr %s30, 16
          %s337 = scalar_lea.hbm %s2, %s336
          %s339 = sshll.u32 %s332, 4
          %s340 = int_to_ptr.vmem [resolvable:$true] %s339
          %342 = dma.hbm_to_vmem [thread:$0]  %s337, 16, %s340, %s330
        $region36: #{tpu_custom_call.1} parent=27 // pred_fallthru
          _
        // Predicated region
        $region37: #{tpu_custom_call.1} parent=27 // pred_check
          %p343 = pneg %p123
        $region38: #{tpu_custom_call.1} parent=27 // pred_check_branch
          %345 = sbr.rel (%p343) target = $region40
        $region39: #{tpu_custom_call.1} parent=27 // pred_region
          %s346 = sand.u32 %s30, 1
          %s347 = scalar_lea.sflag [#allocation20], %s346
          %s348 = sand.u32 %s113, 1
          %s349 = scalar_lea.vmem [#allocation19], %s348
          %s351 = ssub.s32 16, 16
          %352 = vsyncadd %s347, %s351
          %s353 = smul.addr %s30, 16
          %s354 = scalar_lea.hbm %s3, %s353
          %s356 = sshll.u32 %s349, 4
          %s357 = int_to_ptr.vmem [resolvable:$true] %s356
          %359 = dma.hbm_to_vmem [thread:$0]  %s354, 16, %s357, %s347
        $region40: #{tpu_custom_call.1} parent=27 // pred_fallthru
          _
        // Predicated region
        $region41: #{tpu_custom_call.1} parent=27 // pred_check
          %p360 = pneg %p149
        $region42: #{tpu_custom_call.1} parent=27 // pred_check_branch
          %362 = sbr.rel (%p360) target = $region44
        $region43: #{tpu_custom_call.1} parent=27 // pred_region
          %s363 = sand.u32 %s30, 1
          %s364 = scalar_lea.sflag [#allocation20], %s363
          %s365 = sand.u32 %s139, 1
          %s366 = smul.addr %s365, 4
          %s367 = scalar_lea.vmem [#allocation21], %s366
          %s369 = ssub.s32 64, 64
          %370 = vsyncadd %s364, %s369
          %s371 = smul.addr %s30, 64
          %s372 = scalar_lea.hbm %s4, %s371
          %s374 = sshll.u32 %s367, 4
          %s375 = int_to_ptr.vmem [resolvable:$true] %s374
          %377 = dma.hbm_to_vmem [thread:$0]  %s372, 64, %s375, %s364
        $region44: #{tpu_custom_call.1} parent=27 // pred_fallthru
          _
        // Predicated region
        $region45: #{tpu_custom_call.1} parent=27 // pred_check
          %p378 = pneg %p175
        $region46: #{tpu_custom_call.1} parent=27 // pred_check_branch
          %380 = sbr.rel (%p378) target = $region48
        $region47: #{tpu_custom_call.1} parent=27 // pred_region
          %s381 = sand.u32 %s165, 1
          %s382 = scalar_lea.sflag [#allocation23], %s381
          %s383 = sand.u32 %s165, 1
          %s384 = smul.addr %s383, 8
          %s385 = scalar_lea.vmem [#allocation22], %s384
          %s387 = ssub.s32 128, 128
          %388 = vsyncadd %s382, %s387
          %s389 = smul.addr %s30, 128
          %s390 = scalar_lea.hbm %s5, %s389
          %s392 = sshll.u32 %s385, 4
          %s393 = int_to_ptr.vmem [resolvable:$true] %s392
          %395 = dma.hbm_to_vmem [thread:$0]  %s390, 128, %s393, %s382
        $region48: #{tpu_custom_call.1} parent=27 // pred_fallthru
          _
      $region28: #{tpu_custom_call.1} parent=5 // pred_fallthru
        _
      %p396 = scmp.le.s32.totalorder 1, %s30
      %p397 = scmp.lt.s32.totalorder %s30, 3
      %p398 = pnand %p396, %p397
      %p399 = pneg %p398
      // Predicated region
      $region49: #{tpu_custom_call.1} parent=5 // pred_check
        _
      $region50: #{tpu_custom_call.1} parent=5 // pred_check_branch
        %401 = sbr.rel (%p398) target = $region52
      $region51: #{tpu_custom_call.1} parent=5 // pred_region
        %s402 = ssub.s32 %s30, 1
        // Predicated region
        $region53: #{tpu_custom_call.1} parent=51 // pred_check
          %p403 = pneg %p51
        $region54: #{tpu_custom_call.1} parent=51 // pred_check_branch
          %405 = sbr.rel (%p403) target = $region56
        $region55: #{tpu_custom_call.1} parent=51 // pred_region
          %406 = dma.done [#allocation13], 32
        $region56: #{tpu_custom_call.1} parent=51 // pred_fallthru
          _
        %s407 = sand.u32 %s35, 1
        %s408 = scalar_lea.sflag [#allocation17], %s407
        %s409 = sand.u32 %s64, 1
        %s410 = smul.addr %s409, 32
        %s411 = scalar_lea.vmem [#allocation16], %s410
        // Predicated region
        $region57: #{tpu_custom_call.1} parent=51 // pred_check
          %p412 = pneg %p77
        $region58: #{tpu_custom_call.1} parent=51 // pred_check_branch
          %414 = sbr.rel (%p412) target = $region60
        $region59: #{tpu_custom_call.1} parent=51 // pred_region
          %415 = dma.done %s408, 512
        $region60: #{tpu_custom_call.1} parent=51 // pred_fallthru
          _
        %s416 = sand.u32 %s35, 1
        %s417 = scalar_lea.sflag [#allocation17], %s416
        %s418 = sand.u32 %s90, 1
        %s419 = scalar_lea.vmem [#allocation18], %s418
        // Predicated region
        $region61: #{tpu_custom_call.1} parent=51 // pred_check
          %p420 = pneg %p103
        $region62: #{tpu_custom_call.1} parent=51 // pred_check_branch
          %422 = sbr.rel (%p420) target = $region64
        $region63: #{tpu_custom_call.1} parent=51 // pred_region
          %423 = dma.done %s417, 16
        $region64: #{tpu_custom_call.1} parent=51 // pred_fallthru
          _
        %s424 = sand.u32 %s35, 1
        %s425 = scalar_lea.sflag [#allocation20], %s424
        %s426 = sand.u32 %s116, 1
        %s427 = scalar_lea.vmem [#allocation19], %s426
        // Predicated region
        $region65: #{tpu_custom_call.1} parent=51 // pred_check
          %p428 = pneg %p129
        $region66: #{tpu_custom_call.1} parent=51 // pred_check_branch
          %430 = sbr.rel (%p428) target = $region68
        $region67: #{tpu_custom_call.1} parent=51 // pred_region
          %431 = dma.done %s425, 16
        $region68: #{tpu_custom_call.1} parent=51 // pred_fallthru
          _
        %s432 = sand.u32 %s35, 1
        %s433 = scalar_lea.sflag [#allocation20], %s432
        %s434 = sand.u32 %s142, 1
        %s435 = smul.addr %s434, 4
        %s436 = scalar_lea.vmem [#allocation21], %s435
        // Predicated region
        $region69: #{tpu_custom_call.1} parent=51 // pred_check
          %p437 = pneg %p155
        $region70: #{tpu_custom_call.1} parent=51 // pred_check_branch
          %439 = sbr.rel (%p437) target = $region72
        $region71: #{tpu_custom_call.1} parent=51 // pred_region
          %440 = dma.done %s433, 64
        $region72: #{tpu_custom_call.1} parent=51 // pred_fallthru
          _
        %s441 = sand.u32 %s168, 1
        %s442 = scalar_lea.sflag [#allocation23], %s441
        %s443 = sand.u32 %s168, 1
        %s444 = smul.addr %s443, 8
        %s445 = scalar_lea.vmem [#allocation22], %s444
        // Predicated region
        $region73: #{tpu_custom_call.1} parent=51 // pred_check
          %p446 = pneg %p181
        $region74: #{tpu_custom_call.1} parent=51 // pred_check_branch
          %448 = sbr.rel (%p446) target = $region76
        $region75: #{tpu_custom_call.1} parent=51 // pred_region
          %449 = dma.done %s442, 128
        $region76: #{tpu_custom_call.1} parent=51 // pred_fallthru
          _
        %p450 = pneg %p51
        %p451 = pneg %p48
        %s452 = sand.u32 %s35, 1
        %s453 = scalar_lea.sflag [#allocation17], %s452
        %s454 = sand.u32 %s64, 1
        %s455 = smul.addr %s454, 32
        %s456 = scalar_lea.vmem [#allocation16], %s455
        %p457 = pneg %p77
        %p458 = pneg %p74
        %s459 = sand.u32 %s35, 1
        %s460 = scalar_lea.sflag [#allocation17], %s459
        %s461 = sand.u32 %s90, 1
        %s462 = scalar_lea.vmem [#allocation18], %s461
        %p463 = pneg %p103
        %p464 = pneg %p100
        %s465 = sand.u32 %s35, 1
        %s466 = scalar_lea.sflag [#allocation20], %s465
        %s467 = sand.u32 %s116, 1
        %s468 = scalar_lea.vmem [#allocation19], %s467
        %p469 = pneg %p129
        %p470 = pneg %p126
        %s471 = sand.u32 %s35, 1
        %s472 = scalar_lea.sflag [#allocation20], %s471
        %s473 = sand.u32 %s142, 1
        %s474 = smul.addr %s473, 4
        %s475 = scalar_lea.vmem [#allocation21], %s474
        %p476 = pneg %p155
        %p477 = pneg %p152
        %s478 = sand.u32 %s168, 1
        %s479 = scalar_lea.sflag [#allocation23], %s478
        %s480 = sand.u32 %s168, 1
        %s481 = smul.addr %s480, 8
        %s482 = scalar_lea.vmem [#allocation22], %s481
        %p483 = pneg %p181
        %p484 = pneg %p178
        %p485 = pneg %p202
        %p486 = pneg %p199
        %p487 = pneg %p223
        %p488 = pneg %p220
        %p489 = pneg %p244
        %p490 = pneg %p241
        %p491 = pneg %p270
        %p492 = pneg %p267
        %s493 = sand.u32 %s257, 1
        %s494 = scalar_lea.sflag [#allocation14], %s493
        %s495 = sand.u32 %s257, 1
        %s496 = scalar_lea.vmem [#allocation25], %s495
        %p498 = scmp.eq.s32.totalorder %s35, 0
        // Predicated region
        $region77: #{tpu_custom_call.1} parent=51 // pred_check
          %p499 = pneg %p498
        $region78: #{tpu_custom_call.1} parent=51 // pred_check_branch
          %501 = sbr.rel (%p499) target = $region80
        $region79: #{tpu_custom_call.1} parent=51 // pred_region
          %vm502 = vcmask 3072
          %503 = vst.msk [vmem:[#allocation2] sm:$0xf] %vm502, -inf
          %504 = vst.msk [vmem:[#allocation3] sm:$0xf] %vm502, 0.0
          %505 = vst.msk [vmem:[#allocation4] sm:$0xf] %vm502, -inf
          %506 = vst.msk [vmem:[#allocation5] sm:$0xf] %vm502, 0.0
          %vm507 = vcmask 5120
          %508 = vst.msk [vmem:[#allocation6] sm:$0x3f] %vm507, -inf
          %509 = vst.msk [vmem:[#allocation7] sm:$0x3f] %vm507, 0.0
          %vm510 = vcmask 27648
          %511 = vst.msk [vmem:[#allocation8] sm:$0xf] %vm510, 0.0
          %vm512 = vcmask 44032
          %513 = vst.msk [vmem:[#allocation9] sm:$0xf] %vm512, 0.0
          %vm514 = vcmask 0
          %515 = vst.msk [vmem:[#allocation10] sm:$0x1] %vm514, 0.0
          %516 = vst.msk [vmem:[#allocation11] sm:$0x1] %vm514, 0.0
        $region80: #{tpu_custom_call.1} parent=51 // pred_fallthru
          _
        %v517 = vld [vmem:[#allocation12] sm:$0x3]
        %v518 = vld [vmem:[%s411] sm:$0xf]
        %v519 = vld [vmem:[%s411 + $0x4] sm:$0xf]
        %v520 = vld [vmem:[%s411 + $0x8] sm:$0xf]
        %v521 = vld [vmem:[%s411 + $0xc] sm:$0xf]
        %v522 = vld [vmem:[%s411 + $0x10] sm:$0xf]
        %v523 = vld [vmem:[%s411 + $0x14] sm:$0xf]
        %v524 = vld [vmem:[%s411 + $0x18] sm:$0xf]
        %v525 = vld [vmem:[%s411 + $0x1c] sm:$0xf]
        %v526 = vld [vmem:[%s419] sm:$0x1]
        %v528 = vlaneseq
        %v529 = vshrl.u32 %v528, 7
        %v530 = vsub.s32 0, %v529
        %v531 = vrot.slane %v526, %v530
        %v541 = vunpack.c.l.b16 %v518
        %v542 = vunpack.c.l.b16 %v519
        %v543 = vunpack.c.l.b16 %v520
        %v544 = vunpack.c.l.b16 %v521
        %v545 = vunpack.c.l.b16 %v522
        %v546 = vunpack.c.l.b16 %v523
        %v547 = vunpack.c.l.b16 %v524
        %v548 = vunpack.c.l.b16 %v525
        %v549 = vpack.c.b16 %v542, %v541
        %v550 = vpack.c.b16 %v544, %v543
        %v551 = vpack.c.b16 %v546, %v545
        %v552 = vpack.c.b16 %v548, %v547
        %vm557 = vcmask 523264
        %v559 = vsel %vm557, %v517, 0
        %561 = vmatprep.subr.bf16.mxu0 0
        %562 = vmatpush1.bf16.msra.mxu0 0
        %563 = vmatprep.subr.bf16.mxu0 0
        %564 = vmatpush1.bf16.msra.mxu0 0
        %565 = vmatprep.subr.bf16.mxu0 0
        %566 = vmatpush1.bf16.msra.mxu0 0
        %567 = vmatprep.subr.bf16.mxu0 0
        %568 = vmatpush1.bf16.msra.mxu0 0
        %569 = vmatprep.subr.bf16.mxu0 0
        %570 = vmatpush1.bf16.msra.mxu0 %v552
        %571 = vmatprep.subr.bf16.mxu0 0
        %572 = vmatpush1.bf16.msra.mxu0 %v551
        %573 = vmatprep.subr.bf16.mxu0 0
        %574 = vmatpush1.bf16.msra.mxu0 %v550
        %575 = vmatprep.subr.bf16.mxu0 0
        %576 = vmatpush1.bf16.msra.mxu0 %v549
        %577 = vmatprep.subr.bf16.mxu0 0
        %578 = vmatpush2.bf16.msra.mxu0 0
        %579 = vmatprep.subr.bf16.mxu0 0
        %580 = vmatpush2.bf16.msra.mxu0 0
        %581 = vmatprep.subr.bf16.mxu0 0
        %582 = vmatpush2.bf16.msra.mxu0 0
        %583 = vmatprep.subr.bf16.mxu0 0
        %584 = vmatpush2.bf16.msra.mxu0 0
        %585 = vmatprep.subr.bf16.mxu0 0
        %586 = vmatpush2.bf16.msra.mxu0 0
        %587 = vmatprep.subr.bf16.mxu0 0
        %588 = vmatpush2.bf16.msra.mxu0 0
        %589 = vmatprep.subr.bf16.mxu0 0
        %590 = vmatpush2.bf16.msra.mxu0 0
        %591 = vmatprep.subr.bf16.mxu0 0
        %592 = vmatpush2.bf16.msra.mxu0 0
        %593 = vmatprep.mubr.bf16.mxu0 0
        %594 = vmatmul.mubr.bf16.gmra.mxu0 %v559
        %v595 = vpop.f32.mrf.mxu0
        %v596 = vadd.f32 %v531, %v595
        %v597 = vpop.f32.mrf.mxu0
        %v598 = vpop.f32.mrf.mxu0
        %v599 = vpop.f32.mrf.mxu0
        %600 = vdwg.mxu0
        %v601 = vld [vmem:[%s436] sm:$0xf]
        %v602 = vld [vmem:[%s445] sm:$0x3f]
        %v603 = vld [vmem:[%s427] sm:$0x1]
        %vm604 = vcmask 1043456
        %v605 = vsel %vm604, %v596, 0.0
        %v606 = vrot.slane %v605, 4
        %v607 = vadd.f32 %v605, %v606
        %v608 = vrot.slane %v607, 2
        %v609 = vadd.f32 %v607, %v608
        %v610 = vrot.slane %v609, 1
        %v611 = vadd.f32 %v609, %v610
        %v612 = vrcp.pop 4.0
        %v613 = vmul.f32 %v611, %v612
        %v614 = vsub.f32 %v596, %v613
        %v615 = vmul.f32 %v614, %v614
        %v616 = vsel %vm604, %v615, 0.0
        %v617 = vrot.slane %v616, 4
        %v618 = vadd.f32 %v616, %v617
        %v619 = vrot.slane %v618, 2
        %v620 = vadd.f32 %v618, %v619
        %v621 = vrot.slane %v620, 1
        %v622 = vadd.f32 %v620, %v621
        %v623 = vmul.f32 %v622, 0.33333334
        %v624 = vld [vmem:[#allocation10] sm:$0x1]
        %v625 = vadd.f32 %v623, 1e-06
        %v626 = vrsqrt.pop %v625
        %v627 = vmul.f32 %v625, %v626
        %vm628 = vcmp.eq.f32.partialorder %v625, inf
        %v629 = vsel %vm628, %v625, %v627
        %vm630 = vcmp.eq.f32.partialorder %v625, 0.0
        %v631 = vand.u32 %v625, 2147483648
        %v632 = vsel %vm630, %v631, %v629
        %vm633 = vcmask 1040384
        %v634 = vsel %vm633, %v632, 0.0
        %635 = vadd.xlane.f32.xlu0 %v634
        %v636 = vpop.xlane.xlu0 %635
        %v637 = vrot.slane %v636, 4
        %v638 = vadd.f32 %v636, %v637
        %v639 = vrot.slane %v638, 2
        %v640 = vadd.f32 %v638, %v639
        %v641 = vrot.slane %v640, 1
        %v642 = vadd.f32 %v640, %v641
        %s643 = vtos %v642
        %v644 = vstv %s643
        %v645 = vadd.f32 %v624, %v644
        %vm646 = vcmask 0
        %647 = vst.msk [vmem:[#allocation10] sm:$0x1] %vm646, %v645
        %vm648 = vcmask 1045504
        %v649 = vsel %vm648, %v602, 0.0
        %v650 = vrot.slane %v649, 4
        %v651 = vadd.f32 %v649, %v650
        %v652 = vrot.slane %v651, 2
        %v653 = vadd.f32 %v651, %v652
        %v654 = vrot.slane %v653, 1
        %v655 = vadd.f32 %v653, %v654
        %v656 = vrcp.pop 6.0
        %v657 = vmul.f32 %v655, %v656
        %v658 = vsub.f32 %v602, %v657
        %v659 = vmul.f32 %v658, %v658
        %v660 = vsel %vm648, %v659, 0.0
        %v661 = vrot.slane %v660, 4
        %v662 = vadd.f32 %v660, %v661
        %v663 = vrot.slane %v662, 2
        %v664 = vadd.f32 %v662, %v663
        %v665 = vrot.slane %v664, 1
        %v666 = vadd.f32 %v664, %v665
        %v667 = vmul.f32 %v666, 0.2
        %v668 = vld [vmem:[#allocation11] sm:$0x1]
        %v669 = vadd.f32 %v667, 1e-06
        %v670 = vrsqrt.pop %v669
        %v671 = vmul.f32 %v669, %v670
        %vm672 = vcmp.eq.f32.partialorder %v669, inf
        %v673 = vsel %vm672, %v669, %v671
        %vm674 = vcmp.eq.f32.partialorder %v669, 0.0
        %v675 = vand.u32 %v669, 2147483648
        %v676 = vsel %vm674, %v675, %v673
        %v677 = vsel %vm633, %v676, 0.0
        %678 = vadd.xlane.f32.xlu0 %v677
        %v679 = vpop.xlane.xlu0 %678
        %v680 = vrot.slane %v679, 4
        %v681 = vadd.f32 %v679, %v680
        %v682 = vrot.slane %v681, 2
        %v683 = vadd.f32 %v681, %v682
        %v684 = vrot.slane %v683, 1
        %v685 = vadd.f32 %v683, %v684
        %s686 = vtos %v685
        %v687 = vstv %s686
        %v688 = vadd.f32 %v668, %v687
        %689 = vst.msk [vmem:[#allocation11] sm:$0x1] %vm646, %v688
        %v690 = vmul.f32 %v603, 0.9
        %v691 = vmul.f32 %v613, 0.1
        %v692 = vadd.f32 %v690, %v691
        %693 = vst [vmem:[%s496] sm:$0x1] %v692
        %v695 = vlaneseq
        %v696 = vshrl.u32 %v695, 7
        %v697 = vsub.s32 0, %v696
        %v698 = vrot.slane %v603, %v697
        %v700 = vsub.f32 %v596, %v698
        %v701 = vmul.f32 %v700, 25.0
        %v702 = vld [vmem:[#allocation2] sm:$0xf]
        %v703 = vsel %vm604, %v701, -inf
        %704 = vmax.xlane.f32.xlu0 %v703
        %v705 = vpop.xlane.xlu0 %704
        %v706 = vmax.f32 %v702, %v705
        %v707 = vsub.f32 %v702, %v706
        %v708 = vmul.f32 %v707, 1.442695
        %v709 = vpow.pop %v708
        %711 = vset.pattern.permute.xlu0 0
        %712 = vperm.xlu0 %711, %v706
        %v713 = vpop.permute.xlu0 %712
        %v715 = vsub.f32 %v701, %v713
        %v716 = vmul.f32 %v715, 1.442695
        %v717 = vpow.pop %v716
        %v718 = vld [vmem:[#allocation3] sm:$0xf]
        %v719 = vmul.f32 %v709, %v718
        %v720 = vsel %vm604, %v717, 0.0
        %721 = vadd.xlane.f32.xlu0 %v720
        %v722 = vpop.xlane.xlu0 %721
        %v723 = vadd.f32 %v719, %v722
        %vm724 = vcmask 3072
        %725 = vst.msk [vmem:[#allocation3] sm:$0xf] %vm724, %v723
        %726 = vst.msk [vmem:[#allocation2] sm:$0xf] %vm724, %v706
        %v727 = vmul.f32 %v601, 10.0
        %v728 = vld [vmem:[#allocation4] sm:$0xf]
        %v729 = vsel %vm604, %v727, -inf
        %730 = vmax.xlane.f32.xlu0 %v729
        %v731 = vpop.xlane.xlu0 %730
        %v732 = vmax.f32 %v728, %v731
        %v733 = vsub.f32 %v728, %v732
        %v734 = vmul.f32 %v733, 1.442695
        %v735 = vpow.pop %v734
        %v736 = vld [vmem:[#allocation5] sm:$0xf]
        %v737 = vmul.f32 %v735, %v736
        %739 = vset.pattern.permute.xlu0 0
        %740 = vperm.xlu0 %739, %v732
        %v741 = vpop.permute.xlu0 %740
        %v743 = vsub.f32 %v727, %v741
        %v744 = vmul.f32 %v743, 1.442695
        %v745 = vpow.pop %v744
        %v746 = vsel %vm604, %v745, 0.0
        %747 = vadd.xlane.f32.xlu0 %v746
        %v748 = vpop.xlane.xlu0 %747
        %v749 = vadd.f32 %v737, %v748
        %750 = vst.msk [vmem:[#allocation5] sm:$0xf] %vm724, %v749
        %751 = vst.msk [vmem:[#allocation4] sm:$0xf] %vm724, %v732
        %v752 = vmul.f32 %v602, 10.0
        %v753 = vld [vmem:[#allocation6] sm:$0x3f]
        %v754 = vsel %vm648, %v752, -inf
        %755 = vmax.xlane.f32.xlu0 %v754
        %v756 = vpop.xlane.xlu0 %755
        %v757 = vmax.f32 %v753, %v756
        %v758 = vsub.f32 %v753, %v757
        %v759 = vmul.f32 %v758, 1.442695
        %v760 = vpow.pop %v759
        %v761 = vld [vmem:[#allocation7] sm:$0x3f]
        %v762 = vmul.f32 %v760, %v761
        %764 = vset.pattern.permute.xlu0 0
        %765 = vperm.xlu0 %764, %v757
        %v766 = vpop.permute.xlu0 %765
        %v768 = vsub.f32 %v752, %v766
        %v769 = vmul.f32 %v768, 1.442695
        %v770 = vpow.pop %v769
        %v771 = vsel %vm648, %v770, 0.0
        %772 = vadd.xlane.f32.xlu0 %v771
        %v773 = vpop.xlane.xlu0 %772
        %v774 = vadd.f32 %v762, %v773
        %vm775 = vcmask 5120
        %776 = vst.msk [vmem:[#allocation7] sm:$0x3f] %vm775, %v774
        %777 = vst.msk [vmem:[#allocation6] sm:$0x3f] %vm775, %v757
        %v778 = vld [vmem:[#allocation8] sm:$0xf]
        %780 = vset.pattern.permute.xlu0 0
        %781 = vperm.xlu0 %780, %v709
        %v782 = vpop.permute.xlu0 %781
        %v784 = vmul.f32 %v782, %v778
        %785 = vmatprep.subr.mxu0 0.0
        %786 = vmatpush1.xpose.msra.mxu0 0.0
        %787 = vmatprep.subr.mxu0 0.0
        %788 = vmatpush1.xpose.msra.mxu0 0.0
        %789 = vmatprep.subr.mxu0 0.0
        %790 = vmatpush1.xpose.msra.mxu0 0.0
        %791 = vmatprep.subr.mxu0 0.0
        %792 = vmatpush1.xpose.msra.mxu0 0.0
        %793 = vmatprep.subr.mxu0 0.0
        %794 = vmatpush1.xpose.msra.mxu0 0.0
        %795 = vmatprep.subr.mxu0 0.0
        %796 = vmatpush1.xpose.msra.mxu0 0.0
        %797 = vmatprep.subr.mxu0 0.0
        %798 = vmatpush1.xpose.msra.mxu0 0.0
        %799 = vmatprep.subr.mxu0 0.0
        %800 = vmatpush1.xpose.msra.mxu0 0.0
        %801 = vmatprep.subr.mxu0 0.0
        %802 = vmatpush1.xpose.msra.mxu0 0.0
        %803 = vmatprep.subr.mxu0 0.0
        %804 = vmatpush1.xpose.msra.mxu0 0.0
        %805 = vmatprep.subr.mxu0 0.0
        %806 = vmatpush1.xpose.msra.mxu0 0.0
        %807 = vmatprep.subr.mxu0 0.0
        %808 = vmatpush1.xpose.msra.mxu0 0.0
        %809 = vmatprep.subr.mxu0 0.0
        %810 = vmatpush1.xpose.msra.mxu0 0.0
        %811 = vmatprep.subr.mxu0 0.0
        %812 = vmatpush1.xpose.msra.mxu0 0.0
        %813 = vmatprep.subr.mxu0 0.0
        %814 = vmatpush1.xpose.msra.mxu0 0.0
        %815 = vmatprep.subr.mxu0 0.0
        %816 = vmatpush1.xpose.msra.mxu0 %v727
        %817 = vmatprep.subr.mxu0 0.0
        %818 = vmatpush2.xpose.msra.mxu0 0.0
        %819 = vmatprep.subr.mxu0 0.0
        %820 = vmatpush2.xpose.msra.mxu0 0.0
        %821 = vmatprep.subr.mxu0 0.0
        %822 = vmatpush2.xpose.msra.mxu0 0.0
        %823 = vmatprep.subr.mxu0 0.0
        %824 = vmatpush2.xpose.msra.mxu0 0.0
        %825 = vmatprep.subr.mxu0 0.0
        %826 = vmatpush2.xpose.msra.mxu0 0.0
        %827 = vmatprep.subr.mxu0 0.0
        %828 = vmatpush2.xpose.msra.mxu0 0.0
        %829 = vmatprep.subr.mxu0 0.0
        %830 = vmatpush2.xpose.msra.mxu0 0.0
        %831 = vmatprep.subr.mxu0 0.0
        %832 = vmatpush2.xpose.msra.mxu0 0.0
        %833 = vmatprep.subr.mxu0 0.0
        %834 = vmatpush2.xpose.msra.mxu0 0.0
        %835 = vmatprep.subr.mxu0 0.0
        %836 = vmatpush2.xpose.msra.mxu0 0.0
        %837 = vmatprep.subr.mxu0 0.0
        %838 = vmatpush2.xpose.msra.mxu0 0.0
        %839 = vmatprep.subr.mxu0 0.0
        %840 = vmatpush2.xpose.msra.mxu0 0.0
        %841 = vmatprep.subr.mxu0 0.0
        %842 = vmatpush2.xpose.msra.mxu0 0.0
        %843 = vmatprep.subr.mxu0 0.0
        %844 = vmatpush2.xpose.msra.mxu0 0.0
        %845 = vmatprep.subr.mxu0 0.0
        %846 = vmatpush2.xpose.msra.mxu0 0.0
        %847 = vmatprep.subr.mxu0 0.0
        %848 = vmatpush2.xpose.msra.mxu0 0.0
        %849 = vmatprep.mubr.f32.mxu0 0.0
        %850 = vmatmul.mubr.f32.gmra.mxu0 %v717
        %v851 = vpop.f32.mrf.mxu0
        %v852 = vadd.f32 0.0, %v851
        %v853 = vpop.f32.mrf.mxu0
        %854 = vdwg.mxu0
        %v855 = vadd.f32 %v784, %v852
        %vm856 = vcmask 27648
        %857 = vst.msk [vmem:[#allocation8] sm:$0xf] %vm856, %v855
        %v858 = vld [vmem:[#allocation9] sm:$0xf]
        %v859 = vmul.f32 %v782, %v858
        %860 = vmatprep.subr.mxu0 0.0
        %861 = vmatpush1.xpose.msra.mxu0 0.0
        %862 = vmatprep.subr.mxu0 0.0
        %863 = vmatpush1.xpose.msra.mxu0 0.0
        %864 = vmatprep.subr.mxu0 0.0
        %865 = vmatpush1.xpose.msra.mxu0 0.0
        %866 = vmatprep.subr.mxu0 0.0
        %867 = vmatpush1.xpose.msra.mxu0 0.0
        %868 = vmatprep.subr.mxu0 0.0
        %869 = vmatpush1.xpose.msra.mxu0 0.0
        %870 = vmatprep.subr.mxu0 0.0
        %871 = vmatpush1.xpose.msra.mxu0 0.0
        %872 = vmatprep.subr.mxu0 0.0
        %873 = vmatpush1.xpose.msra.mxu0 0.0
        %874 = vmatprep.subr.mxu0 0.0
        %875 = vmatpush1.xpose.msra.mxu0 0.0
        %876 = vmatprep.subr.mxu0 0.0
        %877 = vmatpush1.xpose.msra.mxu0 0.0
        %878 = vmatprep.subr.mxu0 0.0
        %879 = vmatpush1.xpose.msra.mxu0 0.0
        %880 = vmatprep.subr.mxu0 0.0
        %881 = vmatpush1.xpose.msra.mxu0 0.0
        %882 = vmatprep.subr.mxu0 0.0
        %883 = vmatpush1.xpose.msra.mxu0 0.0
        %884 = vmatprep.subr.mxu0 0.0
        %885 = vmatpush1.xpose.msra.mxu0 0.0
        %886 = vmatprep.subr.mxu0 0.0
        %887 = vmatpush1.xpose.msra.mxu0 0.0
        %888 = vmatprep.subr.mxu0 0.0
        %889 = vmatpush1.xpose.msra.mxu0 0.0
        %890 = vmatprep.subr.mxu0 0.0
        %891 = vmatpush1.xpose.msra.mxu0 %v752
        %892 = vmatprep.subr.mxu0 0.0
        %893 = vmatpush2.xpose.msra.mxu0 0.0
        %894 = vmatprep.subr.mxu0 0.0
        %895 = vmatpush2.xpose.msra.mxu0 0.0
        %896 = vmatprep.subr.mxu0 0.0
        %897 = vmatpush2.xpose.msra.mxu0 0.0
        %898 = vmatprep.subr.mxu0 0.0
        %899 = vmatpush2.xpose.msra.mxu0 0.0
        %900 = vmatprep.subr.mxu0 0.0
        %901 = vmatpush2.xpose.msra.mxu0 0.0
        %902 = vmatprep.subr.mxu0 0.0
        %903 = vmatpush2.xpose.msra.mxu0 0.0
        %904 = vmatprep.subr.mxu0 0.0
        %905 = vmatpush2.xpose.msra.mxu0 0.0
        %906 = vmatprep.subr.mxu0 0.0
        %907 = vmatpush2.xpose.msra.mxu0 0.0
        %908 = vmatprep.subr.mxu0 0.0
        %909 = vmatpush2.xpose.msra.mxu0 0.0
        %910 = vmatprep.subr.mxu0 0.0
        %911 = vmatpush2.xpose.msra.mxu0 0.0
        %912 = vmatprep.subr.mxu0 0.0
        %913 = vmatpush2.xpose.msra.mxu0 0.0
        %914 = vmatprep.subr.mxu0 0.0
        %915 = vmatpush2.xpose.msra.mxu0 0.0
        %916 = vmatprep.subr.mxu0 0.0
        %917 = vmatpush2.xpose.msra.mxu0 0.0
        %918 = vmatprep.subr.mxu0 0.0
        %919 = vmatpush2.xpose.msra.mxu0 0.0
        %920 = vmatprep.subr.mxu0 0.0
        %921 = vmatpush2.xpose.msra.mxu0 0.0
        %922 = vmatprep.subr.mxu0 0.0
        %923 = vmatpush2.xpose.msra.mxu0 0.0
        %924 = vmatprep.mubr.f32.mxu0 0.0
        %925 = vmatmul.mubr.f32.gmra.mxu0 %v717
        %v926 = vpop.f32.mrf.mxu0
        %v927 = vadd.f32 0.0, %v926
        %v928 = vpop.f32.mrf.mxu0
        %929 = vdwg.mxu0
        %v930 = vadd.f32 %v859, %v927
        %vm931 = vcmask 44032
        %932 = vst.msk [vmem:[#allocation9] sm:$0xf] %vm931, %v930
        %p933 = scmp.eq.s32.totalorder %s35, 1
        // Predicated region
        $region81: #{tpu_custom_call.1} parent=51 // pred_check
          %p934 = pneg %p933
        $region82: #{tpu_custom_call.1} parent=51 // pred_check_branch
          %936 = sbr.rel (%p934) target = $region84
        $region83: #{tpu_custom_call.1} parent=51 // pred_region
          %v937 = vld [vmem:[#allocation3] sm:$0xf]
          %v938 = vrcp.pop %v937
          %v939 = vmul.f32 1.0, %v938
          %v940 = vld [vmem:[#allocation4] sm:$0xf]
          %v941 = vld [vmem:[#allocation5] sm:$0xf]
          %v942 = vlog2.pop %v941
          %v943 = vmul.f32 %v942, 0.6931472
          %v944 = vadd.f32 %v940, %v943
          %v945 = vsel %vm724, %v944, 0.0
          %946 = vadd.xlane.f32.xlu0 %v945
          %v947 = vpop.xlane.xlu0 %946
          %v948 = vrot.slane %v947, 4
          %v949 = vadd.f32 %v947, %v948
          %v950 = vrot.slane %v949, 2
          %v951 = vadd.f32 %v949, %v950
          %v952 = vrot.slane %v951, 1
          %v953 = vadd.f32 %v951, %v952
          %s954 = vtos %v953
          %v955 = vld [vmem:[#allocation6] sm:$0x3f]
          %v956 = vld [vmem:[#allocation7] sm:$0x3f]
          %v957 = vlog2.pop %v956
          %v958 = vmul.f32 %v957, 0.6931472
          %v959 = vadd.f32 %v955, %v958
          %v960 = vsel %vm775, %v959, 0.0
          %961 = vadd.xlane.f32.xlu0 %v960
          %v962 = vpop.xlane.xlu0 %961
          %v963 = vrot.slane %v962, 4
          %v964 = vadd.f32 %v962, %v963
          %v965 = vrot.slane %v964, 2
          %v966 = vadd.f32 %v964, %v965
          %v967 = vrot.slane %v966, 1
          %v968 = vadd.f32 %v966, %v967
          %s969 = vtos %v968
          %v970 = vld [vmem:[%s6] sm:$0xf]
          %v971 = vld [vmem:[#allocation8] sm:$0xf]
          %v972 = vmul.f32 %v970, %v971
          %974 = vset.pattern.permute.xlu0 0
          %975 = vperm.xlu0 %974, %v939
          %v976 = vpop.permute.xlu0 %975
          %v978 = vmul.f32 %v972, %v976
          %v979 = vsel %vm856, %v978, 0.0
          %980 = vadd.xlane.f32.xlu0 %v979
          %v981 = vpop.xlane.xlu0 %980
          %v982 = vrot.slane %v981, 4
          %v983 = vadd.f32 %v981, %v982
          %v984 = vrot.slane %v983, 2
          %v985 = vadd.f32 %v983, %v984
          %v986 = vrot.slane %v985, 1
          %v987 = vadd.f32 %v985, %v986
          %s988 = vtos %v987
          %v989 = vld [vmem:[%s7] sm:$0xf]
          %v990 = vld [vmem:[#allocation9] sm:$0xf]
          %v991 = vmul.f32 %v989, %v990
          %v992 = vmul.f32 %v991, %v976
          %v993 = vsel %vm931, %v992, 0.0
          %994 = vadd.xlane.f32.xlu0 %v993
          %v995 = vpop.xlane.xlu0 %994
          %v996 = vrot.slane %v995, 4
          %v997 = vadd.f32 %v995, %v996
          %v998 = vrot.slane %v997, 2
          %v999 = vadd.f32 %v997, %v998
          %v1000 = vrot.slane %v999, 1
          %v1001 = vadd.f32 %v999, %v1000
          %s1002 = vtos %v1001
          %s1003 = sadd.f32 %s988, %s1002
          %s1004 = sadd.f32 %s1003, %s954
          %s1005 = smul.f32 %s969, 2.0
          %s1006 = sadd.f32 %s1004, %s1005
          %s1007 = smul.f32 %s1006, 0.0625
          %s1008 = scalar_lea.smem [#allocation24], 0
          %1009 = sst [smem:[%s1008]] %s1007
          %v1010 = vld [vmem:[#allocation10] sm:$0x1]
          %v1011 = vadd.f32 %v1010, 0.0
          %s1012 = vtos %v1011
          %s1013 = smul.f32 %s1012, 0.00390625
          %s1014 = scalar_lea.smem [#allocation24], 1
          %1015 = sst [smem:[%s1014]] %s1013
          %v1016 = vld [vmem:[#allocation11] sm:$0x1]
          %v1017 = vadd.f32 %v1016, 0.0
          %s1018 = vtos %v1017
          %s1019 = smul.f32 %s1018, 0.00390625
          %s1020 = scalar_lea.smem [#allocation24], 2
          %1021 = sst [smem:[%s1020]] %s1019
        $region84: #{tpu_custom_call.1} parent=51 // pred_fallthru
          _
        %s1022 = sand.u32 %s257, 1
        %s1023 = scalar_lea.sflag [#allocation14], %s1022
        %s1024 = sand.u32 %s257, 1
        %s1025 = scalar_lea.vmem [#allocation25], %s1024
        // Predicated region
        $region85: #{tpu_custom_call.1} parent=51 // pred_check
          %p1026 = pneg %p241
        $region86: #{tpu_custom_call.1} parent=51 // pred_check_branch
          %1028 = sbr.rel (%p1026) target = $region88
        $region87: #{tpu_custom_call.1} parent=51 // pred_region
          %s1030 = ssub.s32 16, 16
          %1031 = vsyncadd [#allocation15], %s1030
          %1034 = dma.smem_to_hbm [#allocation24], 16, %s8, [#allocation15]
        $region88: #{tpu_custom_call.1} parent=51 // pred_fallthru
          _
        // Predicated region
        $region89: #{tpu_custom_call.1} parent=51 // pred_check
          %p1035 = pneg %p267
        $region90: #{tpu_custom_call.1} parent=51 // pred_check_branch
          %1037 = sbr.rel (%p1035) target = $region92
        $region91: #{tpu_custom_call.1} parent=51 // pred_region
          %s1039 = ssub.s32 16, 16
          %1040 = vsyncadd %s1023, %s1039
          %s1041 = smul.addr %s35, 16
          %s1042 = scalar_lea.hbm %s9, %s1041
          %s1044 = sshll.u32 %s1025, 4
          %s1045 = int_to_ptr.vmem [resolvable:$true] %s1044
          %1047 = dma.vmem_to_hbm [thread:$0]  %s1045, 16, %s1042, %s1023
        $region92: #{tpu_custom_call.1} parent=51 // pred_fallthru
          _
        // Predicated region
        $region93: #{tpu_custom_call.1} parent=51 // pred_check
          %p1048 = pneg %p241
        $region94: #{tpu_custom_call.1} parent=51 // pred_check_branch
          %1050 = sbr.rel (%p1048) target = $region96
        $region95: #{tpu_custom_call.1} parent=51 // pred_region
          %1051 = dma.done [#allocation15], 16
        $region96: #{tpu_custom_call.1} parent=51 // pred_fallthru
          _
        %1052 = sfence
      $region52: #{tpu_custom_call.1} parent=5 // pred_fallthru
        _
      %p1053 = scmp.le.s32.totalorder 2, %s30
      // Predicated region
      $region97: #{tpu_custom_call.1} parent=5 // pred_check
        %p1054 = pneg %p1053
      $region98: #{tpu_custom_call.1} parent=5 // pred_check_branch
        %1056 = sbr.rel (%p1054) target = $region100
      $region99: #{tpu_custom_call.1} parent=5 // pred_region
        %s1057 = ssub.s32 %s30, 2
        // Predicated region
        $region101: #{tpu_custom_call.1} parent=99 // pred_check
          %p1058 = pneg %p273
        $region102: #{tpu_custom_call.1} parent=99 // pred_check_branch
          %1060 = sbr.rel (%p1058) target = $region104
        $region103: #{tpu_custom_call.1} parent=99 // pred_region
          %s1061 = sand.u32 %s258, 1
          %s1062 = scalar_lea.sflag [#allocation14], %s1061
          %s1063 = sand.u32 %s258, 1
          %s1064 = scalar_lea.vmem [#allocation25], %s1063
          %1065 = dma.done %s1062, 16
        $region104: #{tpu_custom_call.1} parent=99 // pred_fallthru
          _
      $region100: #{tpu_custom_call.1} parent=5 // pred_fallthru
        _
    $region6: #{tpu_custom_call.1} parent=1 // loop_footer
      %s34 = sadd.s32 1, %s30
    $region7: #{tpu_custom_call.1} parent=1 // loop_footer_branch
      %29 = sbr.rel target = $region3
    $region8: #{tpu_custom_call.1} parent=1 // loop_exit
      _
    %1066 = vsyncpa [#allocation13], 1
    %s1067 = scalar_lea.sflag [#allocation13], 1
    %1068 = vsyncpa %s1067, 1
    %1069 = vsyncpa [#allocation17], 1
    %s1070 = scalar_lea.sflag [#allocation17], 1
    %1071 = vsyncpa %s1070, 1
    %1072 = vsyncpa [#allocation20], 1
    %s1073 = scalar_lea.sflag [#allocation20], 1
    %1074 = vsyncpa %s1073, 1
    %1075 = vsyncpa [#allocation23], 1
    %s1076 = scalar_lea.sflag [#allocation23], 1
    %1077 = vsyncpa %s1076, 1
    %1078 = vsyncpa [#allocation14], 1
    %s1079 = scalar_lea.sflag [#allocation14], 1
    %1080 = vsyncpa %s1079, 1
    %1081 = vsyncpa [#allocation15], 1
    %s1082 = scalar_lea.sflag [#allocation15], 1
    %1083 = vsyncpa %s1082, 1

</llo_original>
